<compile_context>
chip_gen: v7x
topology: tpu7x:2x2x1
jax: 0.10.0
libtpu: 0.0.40
codegen_flags: <defaults>
</compile_context>

<pallas_src>
import numpy as np
import jax
import jax.numpy as jnp
from jax.experimental import pallas as pl
from jax.experimental.pallas import tpu as pltpu


def _round_down(x, m):
    return (int(x) // m) * m


def _tpu_vmem_capacity_bytes():
    """Best-effort query of per-TensorCore VMEM capacity (fallback: 128 MiB)."""
    try:
        info = pltpu.get_tpu_info()
        cap = getattr(info, "vmem_capacity_bytes", None)
        if cap:
            return int(cap)
    except Exception:
        pass
    return 128 * 1024 * 1024


def _make_recall_kernel(n1, tk):
    """Kernel over blocks gt/pred (C, tk, tm), out (C, tm), scratch 2x(C, tm) f32."""
    need_mask = (n1 % tk) != 0  # last N1-chunk is partial -> mask padded rows

    def kernel(gt_ref, pred_ref, out_ref, tp_ref, pos_ref):
        k = pl.program_id(1)

        @pl.when(k == 0)
        def _():
            tp_ref[...] = jnp.zeros_like(tp_ref)
            pos_ref[...] = jnp.zeros_like(pos_ref)

        # Elementwise math in the native dtype; accumulate reductions in f32.
        y_pos = jnp.clip(gt_ref[...], 0, 1)
        y_pred_pos = jnp.clip(pred_ref[...], 0, 1)

        if need_mask:
            row = jax.lax.broadcasted_iota(jnp.int32, y_pos.shape, 1)
            valid = (k * tk + row) < n1
            y_pos = jnp.where(valid, y_pos, 0)
            y_pred_pos = jnp.where(valid, y_pred_pos, 0)

        tp_ref[...] += jnp.sum(y_pos * y_pred_pos, axis=1, dtype=jnp.float32)
        pos_ref[...] += jnp.sum(y_pos, axis=1, dtype=jnp.float32)  # == TP + FN

        @pl.when(k == pl.num_programs(1) - 1)
        def _():
            smooth = jnp.float32(1.0)
            out_ref[...] = (tp_ref[...] + smooth) / (pos_ref[...] + smooth)

    return kernel


def _recall_jnp(y_ground_truth, y_prediction, ignore_index=None):
    """Fused pure-jnp path (tiny / lane-sparse inputs) — mirrors the torch code."""
    C = y_prediction.shape[0]
    keep = np.arange(C)
    if ignore_index is not None:
        keep = keep[keep != ignore_index]
    gt = y_ground_truth[keep].astype(jnp.float32)
    pred = y_prediction[keep].astype(jnp.float32)
    y_pred_pos = jnp.clip(pred, 0.0, 1.0)
    y_pos = jnp.clip(gt, 0.0, 1.0)
    tp = jnp.sum(y_pos * y_pred_pos, axis=1)
    fn = jnp.sum(y_pos * (1.0 - y_pred_pos), axis=1)
    return jnp.mean((tp + 1.0) / (tp + fn + 1.0))


def recall(y_ground_truth, y_prediction, ignore_index=None):
    """Pallas TPU implementation of Recall.forward (expected format C x N1 x N2 x ...).

    NOTE: `ignore_index` must be a static Python int (or None), as in the
    original torch module.
    """
    assert y_ground_truth.shape == y_prediction.shape
    shape = y_prediction.shape
    assert len(shape) >= 2, "expected at least C x N1"
    C = int(shape[0])
    N1 = int(shape[1])
    M = int(np.prod(shape[2:])) if len(shape) > 2 else 1

    # Small / lane-sparse problems: pallas_call launch + per-step overhead
    # dominates; XLA's fused reduction is faster.
    # TODO(synk): repack lane-sparse layouts (M < 128, e.g. pure CxN1 inputs)
    # into a lane-dense form instead of falling back to the fused jnp path.
    if M < 128 or y_prediction.size < (1 << 20):
        return _recall_jnp(y_ground_truth, y_prediction, ignore_index)

    # Keep elementwise math in the native floating dtype inside the kernel;
    # only non-float (int / bool mask) inputs are upcast here.
    if not jnp.issubdtype(y_ground_truth.dtype, jnp.floating):
        y_ground_truth = y_ground_truth.astype(jnp.float32)
    if not jnp.issubdtype(y_prediction.dtype, jnp.floating):
        y_prediction = y_prediction.astype(jnp.float32)

    # Free metadata reshape (contiguous): collapse all dims after N1 into M.
    gt = y_ground_truth.reshape(C, N1, M)
    pred = y_prediction.reshape(C, N1, M)
    itemsize = max(gt.dtype.itemsize, pred.dtype.itemsize)

    # ---- generation-aware budgets ------------------------------------------
    vmem_cap = _tpu_vmem_capacity_bytes()
    small_vmem = vmem_cap <= (64 << 20)                 # v7x-like: 64 MiB / TC
    budget = (2 << 20) if small_vmem else (4 << 20)     # per-input tile bytes
    vmem_limit_cap = (40 << 20) if small_vmem else (64 << 20)

    # ---- tile selection: maximize tm (contiguous/lane axis) first ----------
    MAX_TM = 2048
    rows_min = C * min(N1, 8)  # keep at least one sublane-slab per channel
    tm_cap = max(128, _round_down(budget // max(1, rows_min * itemsize), 128))
    tm_cap = min(tm_cap, MAX_TM)
    tm = M if M <= tm_cap else tm_cap

    # v7x-like chips: both TensorCores only get work if the single "parallel"
    # axis has >= 2 grid steps.
    if small_vmem and M >= 256 and pl.cdiv(M, tm) < 2:
        tm = max(128, _round_down(-(-M // 2), 128))

    # N1 (reduction) tiling: keep tc == C, split N1 instead of narrowing tm.
    rows = max(8, budget // (tm * itemsize))
    tk_budget = rows // C
    if tk_budget >= N1:
        tk = N1
    elif tk_budget >= 8:
        tk = _round_down(tk_budget, 8)
    else:
        # TODO(synk): tile the channel axis for pathologically large C instead
        # of narrowing tm / falling back to jnp.
        tm = 128
        rows = max(8, budget // (tm * itemsize))
        tk_budget = rows // C
        if tk_budget >= N1:
            tk = N1
        elif tk_budget >= 8:
            tk = _round_down(tk_budget, 8)
        else:
            return _recall_jnp(y_ground_truth, y_prediction, ignore_index)

    nm = pl.cdiv(M, tm)
    nk = pl.cdiv(N1, tk)
    grid = (nm, nk)

    # ---- VMEM accounting (double-buffered inputs + output + accumulators) --
    in_tile_bytes = C * tk * tm * (gt.dtype.itemsize + pred.dtype.itemsize)
    out_tile_bytes = C * tm * 4
    vmem_est = 2 * in_tile_bytes + 2 * out_tile_bytes + 2 * out_tile_bytes + (4 << 20)
    vmem_limit = int(min(max(vmem_est, 32 << 20), vmem_limit_cap))

    # ---- kernel launch -------------------------------------------------------
    kernel = _make_recall_kernel(N1, tk)
    out = pl.pallas_call(
        kernel,
        out_shape=jax.ShapeDtypeStruct((C, M), jnp.float32),
        grid=grid,
        in_specs=[
            pl.BlockSpec((C, tk, tm), lambda j, k: (0, k, j)),
            pl.BlockSpec((C, tk, tm), lambda j, k: (0, k, j)),
        ],
        out_specs=pl.BlockSpec((C, tm), lambda j, k: (0, j)),
        scratch_shapes=[
            pltpu.VMEM((C, tm), jnp.float32),   # TP accumulator
            pltpu.VMEM((C, tm), jnp.float32),   # sum(y_pos) accumulator
        ],
        compiler_params=pltpu.CompilerParams(
            dimension_semantics=("parallel", "arbitrary"),
            vmem_limit_bytes=vmem_limit,
        ),
    )(gt, pred)

    # ---- tiny wrapper-side finalize (ignore_index + mean) -------------------
    # `out` has the exact (C, M) extent, so padded lanes never reach the mean.
    plane = out
    if ignore_index is not None and 0 <= int(ignore_index) < C:
        ig = int(ignore_index)
        total = jnp.sum(plane, dtype=jnp.float32) - jnp.sum(plane[ig], dtype=jnp.float32)
        return total / float((C - 1) * M)
    return jnp.mean(plane)


if __name__ == "__main__":
    key = jax.random.PRNGKey(0)
    keys = jax.random.split(key, 6)

    # Case 1: Pallas path, full-N1 in-block reduce (nk == 1), ignore channel 0.
    C, N1, N2, N3 = 4, 16, 96, 256     # M = 24576, 1.57M elements
    y_gt = (jax.random.uniform(keys[0], (C, N1, N2, N3)) > 0.5).astype(jnp.float32)
    y_pred = jax.random.uniform(keys[1], (C, N1, N2, N3), dtype=jnp.float32)
    res1 = jax.block_until_ready(recall(y_gt, y_pred, ignore_index=0))
    ref1 = jax.block_until_ready(_recall_jnp(y_gt, y_pred, ignore_index=0))
    np.testing.assert_allclose(np.asarray(res1), np.asarray(ref1), rtol=1e-5, atol=1e-6)

    # Case 2: Pallas path with a chunked (masked) N1 reduction axis and bf16
    # predictions; no ignore_index.  Large N1 forces the "arbitrary" grid axis.
    C2, N1b, Mb = 3, 4096, 512         # 6.3M elements, N1 % tk != 0 -> mask path
    y_gt2 = (jax.random.uniform(keys[2], (C2, N1b, Mb)) > 0.5).astype(jnp.float32)
    y_pred2 = jax.random.uniform(keys[3], (C2, N1b, Mb)).astype(jnp.bfloat16)
    res2 = jax.block_until_ready(recall(y_gt2, y_pred2))
    ref2 = jax.block_until_ready(_recall_jnp(y_gt2, y_pred2))
    np.testing.assert_allclose(np.asarray(res2), np.asarray(ref2), rtol=1e-4, atol=1e-5)

    # Case 3: tiny problem -> fused jnp fallback path.
    y_gt3 = (jax.random.uniform(keys[4], (4, 8, 16, 16)) > 0.5).astype(jnp.float32)
    y_pred3 = jax.random.uniform(keys[5], (4, 8, 16, 16), dtype=jnp.float32)
    res3 = jax.block_until_ready(recall(y_gt3, y_pred3, ignore_index=1))
    assert np.isfinite(np.asarray(res3))

    print("KERNEL_OK")
</pallas_src>

<mosaic_0001>
module attributes {stable_mosaic.version = 11 : i64} {
  func.func @kernel(%arg0: i32, %arg1: i32, %arg2: memref<4x16x2048xf32, #tpu.memory_space<vmem>>, %arg3: memref<4x16x2048xf32, #tpu.memory_space<vmem>>, %arg4: memref<4x2048xf32, #tpu.memory_space<vmem>>, %arg5: memref<4x2048xf32, #tpu.memory_space<vmem>>, %arg6: memref<4x2048xf32, #tpu.memory_space<vmem>>) attributes {dimension_semantics = [#tpu.dimension_semantics<parallel>, #tpu.dimension_semantics<arbitrary>], iteration_bounds = array<i64: 12, 1>, scalar_prefetch = 0 : i64, scratch_operands = 2 : i64, tpu.core_type = #tpu.core_type<tc>, window_params = [{transform_indices = @transform_0, window_bounds = array<i64: 4, 16, 2048>}, {transform_indices = @transform_1, window_bounds = array<i64: 4, 16, 2048>}, {transform_indices = @transform_2, window_bounds = array<i64: 4, 2048>}]} {
    %c0_i32 = arith.constant 0 : i32
    %0 = arith.cmpi eq, %arg1, %c0_i32 : i32
    %1 = arith.extui %0 : i1 to i32
    %c0_i32_0 = arith.constant 0 : i32
    %2 = arith.cmpi ne, %1, %c0_i32_0 : i32
    scf.if %2 {
      %cst_20 = arith.constant 0.000000e+00 : f32
      %29 = vector.broadcast %cst_20 : f32 to vector<4x2048xf32>
      %c0_21 = arith.constant 0 : index
      %c0_22 = arith.constant 0 : index
      %30 = vector.load %arg5[%c0_21, %c0_22] : memref<4x2048xf32, #tpu.memory_space<vmem>>, vector<4x2048xf32>
      tpu.vector_store %arg5[%c0_21, %c0_22], %29 {strides = array<i32>} : memref<4x2048xf32, #tpu.memory_space<vmem>>, vector<4x2048xf32>,
      %cst_23 = arith.constant 0.000000e+00 : f32
      %31 = vector.broadcast %cst_23 : f32 to vector<4x2048xf32>
      %c0_24 = arith.constant 0 : index
      %c0_25 = arith.constant 0 : index
      %32 = vector.load %arg6[%c0_24, %c0_25] : memref<4x2048xf32, #tpu.memory_space<vmem>>, vector<4x2048xf32>
      tpu.vector_store %arg6[%c0_24, %c0_25], %31 {strides = array<i32>} : memref<4x2048xf32, #tpu.memory_space<vmem>>, vector<4x2048xf32>,
    } else {
    }
    %c0 = arith.constant 0 : index
    %c0_1 = arith.constant 0 : index
    %c0_2 = arith.constant 0 : index
    %3 = vector.load %arg2[%c0, %c0_1, %c0_2] : memref<4x16x2048xf32, #tpu.memory_space<vmem>>, vector<4x16x2048xf32>
    %c0_i32_3 = arith.constant 0 : i32
    %c1_i32 = arith.constant 1 : i32
    %4 = arith.sitofp %c0_i32_3 : i32 to f32
    %5 = vector.broadcast %4 : f32 to vector<4x16x2048xf32>
    %6 = arith.maximumf %5, %3 : vector<4x16x2048xf32>
    %7 = arith.sitofp %c1_i32 : i32 to f32
    %8 = vector.broadcast %7 : f32 to vector<4x16x2048xf32>
    %9 = arith.minimumf %8, %6 : vector<4x16x2048xf32>
    %c0_4 = arith.constant 0 : index
    %c0_5 = arith.constant 0 : index
    %c0_6 = arith.constant 0 : index
    %10 = vector.load %arg3[%c0_4, %c0_5, %c0_6] : memref<4x16x2048xf32, #tpu.memory_space<vmem>>, vector<4x16x2048xf32>
    %c0_i32_7 = arith.constant 0 : i32
    %c1_i32_8 = arith.constant 1 : i32
    %11 = arith.sitofp %c0_i32_7 : i32 to f32
    %12 = vector.broadcast %11 : f32 to vector<4x16x2048xf32>
    %13 = arith.maximumf %12, %10 : vector<4x16x2048xf32>
    %14 = arith.sitofp %c1_i32_8 : i32 to f32
    %15 = vector.broadcast %14 : f32 to vector<4x16x2048xf32>
    %16 = arith.minimumf %15, %13 : vector<4x16x2048xf32>
    %c0_9 = arith.constant 0 : index
    %c0_10 = arith.constant 0 : index
    %17 = vector.load %arg5[%c0_9, %c0_10] : memref<4x2048xf32, #tpu.memory_space<vmem>>, vector<4x2048xf32>
    %18 = arith.mulf %9, %16 : vector<4x16x2048xf32>
    %cst = arith.constant dense<0.000000e+00> : vector<4x2048xf32>
    %19 = vector.multi_reduction <add>, %18, %cst [1] : vector<4x16x2048xf32> to vector<4x2048xf32>
    %20 = arith.addf %17, %19 : vector<4x2048xf32>
    %c0_11 = arith.constant 0 : index
    %c0_12 = arith.constant 0 : index
    %21 = vector.load %arg5[%c0_11, %c0_12] : memref<4x2048xf32, #tpu.memory_space<vmem>>, vector<4x2048xf32>
    tpu.vector_store %arg5[%c0_11, %c0_12], %20 {strides = array<i32>} : memref<4x2048xf32, #tpu.memory_space<vmem>>, vector<4x2048xf32>,
    %c0_13 = arith.constant 0 : index
    %c0_14 = arith.constant 0 : index
    %22 = vector.load %arg6[%c0_13, %c0_14] : memref<4x2048xf32, #tpu.memory_space<vmem>>, vector<4x2048xf32>
    %cst_15 = arith.constant dense<0.000000e+00> : vector<4x2048xf32>
    %23 = vector.multi_reduction <add>, %9, %cst_15 [1] : vector<4x16x2048xf32> to vector<4x2048xf32>
    %24 = arith.addf %22, %23 : vector<4x2048xf32>
    %c0_16 = arith.constant 0 : index
    %c0_17 = arith.constant 0 : index
    %25 = vector.load %arg6[%c0_16, %c0_17] : memref<4x2048xf32, #tpu.memory_space<vmem>>, vector<4x2048xf32>
    tpu.vector_store %arg6[%c0_16, %c0_17], %24 {strides = array<i32>} : memref<4x2048xf32, #tpu.memory_space<vmem>>, vector<4x2048xf32>,
    %c0_i32_18 = arith.constant 0 : i32
    %26 = arith.cmpi eq, %arg1, %c0_i32_18 : i32
    %27 = arith.extui %26 : i1 to i32
    %c0_i32_19 = arith.constant 0 : i32
    %28 = arith.cmpi ne, %27, %c0_i32_19 : i32
    scf.if %28 {
      %c0_20 = arith.constant 0 : index
      %c0_21 = arith.constant 0 : index
      %29 = vector.load %arg5[%c0_20, %c0_21] : memref<4x2048xf32, #tpu.memory_space<vmem>>, vector<4x2048xf32>
      %cst_22 = arith.constant 1.000000e+00 : f32
      %30 = vector.broadcast %cst_22 : f32 to vector<4x2048xf32>
      %31 = arith.addf %29, %30 : vector<4x2048xf32>
      %c0_23 = arith.constant 0 : index
      %c0_24 = arith.constant 0 : index
      %32 = vector.load %arg6[%c0_23, %c0_24] : memref<4x2048xf32, #tpu.memory_space<vmem>>, vector<4x2048xf32>
      %cst_25 = arith.constant 1.000000e+00 : f32
      %33 = vector.broadcast %cst_25 : f32 to vector<4x2048xf32>
      %34 = arith.addf %32, %33 : vector<4x2048xf32>
      %35 = arith.divf %31, %34 : vector<4x2048xf32>
      %c0_26 = arith.constant 0 : index
      %c0_27 = arith.constant 0 : index
      %36 = vector.load %arg4[%c0_26, %c0_27] : memref<4x2048xf32, #tpu.memory_space<vmem>>, vector<4x2048xf32>
      tpu.vector_store %arg4[%c0_26, %c0_27], %35 {strides = array<i32>} : memref<4x2048xf32, #tpu.memory_space<vmem>>, vector<4x2048xf32>,
    } else {
    }
    return
  }
  func.func @transform_0(%arg0: i32, %arg1: i32) -> (i32, i32, i32) {
    %c0_i32 = arith.constant 0 : i32
    %c0_i32_0 = arith.constant 0 : i32
    return %c0_i32, %arg1, %arg0 : i32, i32, i32
  }
  func.func @transform_1(%arg0: i32, %arg1: i32) -> (i32, i32, i32) {
    %c0_i32 = arith.constant 0 : i32
    %c0_i32_0 = arith.constant 0 : i32
    return %c0_i32, %arg1, %arg0 : i32, i32, i32
  }
  func.func @transform_2(%arg0: i32, %arg1: i32) -> (i32, i32) {
    %c0_i32 = arith.constant 0 : i32
    %c0_i32_0 = arith.constant 0 : i32
    return %c0_i32, %arg0 : i32, i32
  }
}

</mosaic_0001>

<llo_original>
// kernel: tpu_custom_call.1
$region0: #{tpu_custom_call.1}
  #allocation0 [shape = 'u32[]', space=smem, size = 0x4, offset = 0x4, fixed_abs, tag = 'smem constant byte address 0x4 - core index']
  #allocation1 [shape = 'u32[144,128]{1,0:T(1,128)}', space=vmem, size = 0x12000, scoped, tag = 'internal scratch']
  #allocation2 [shape = 'f32[4,2048]{1,0:T(4,128)}', space=vmem, size = 0x8000, scoped, tag = 'scratch operand']
  #allocation3 [shape = 'f32[4,2048]{1,0:T(4,128)}', space=vmem, size = 0x8000, scoped, tag = 'scratch operand']
  %s0 = inlined_call_operand.hbm [shape: f32[4,16,24576], index: 0, kind: input, shape index: {}]
  %s1 = inlined_call_operand.hbm [shape: f32[4,16,24576], index: 1, kind: input, shape index: {}]
  %s2 = inlined_call_operand.hbm [shape: f32[4,24576], index: 2, kind: output, shape index: {}]
  %s3 = sld [smem:[#allocation0]]
  $region57: #{tpu_custom_call.1} parent=0
    _
  %s5 = ssub.s32 1, %s3
  %s6 = scalar_select 0, %s5, %s3
  $region1: #{tpu_custom_call.1} parent=0
    #allocation4 [shape = 'u8[1048576]{0}', space=vmem, size = 0x100000, scoped, tag = 'input window, operand 0']
    #allocation5 [shape = 's32[2]{0}', space=sflag, size = 0x8, scoped, tag = 'scoped memory for tpu_custom_call.1']
    #allocation6 [shape = 's32[2]{0}', space=sflag, size = 0x8, scoped, tag = 'scoped memory for tpu_custom_call.1']
    #allocation7 [shape = 'u8[1048576]{0}', space=vmem, size = 0x100000, scoped, tag = 'input window, operand 1']
    #allocation8 [shape = 's32[2]{0}', space=sflag, size = 0x8, scoped, tag = 'scoped memory for tpu_custom_call.1']
    #allocation9 [shape = 'u8[65536]{0}', space=vmem, size = 0x10000, scoped, tag = 'output window, operand 0']
    %7 = vsyncpa [#allocation5], 0
    %s8 = scalar_lea.sflag [#allocation5], 1
    %9 = vsyncpa %s8, 0
    %10 = vsyncpa [#allocation8], 0
    %s11 = scalar_lea.sflag [#allocation8], 1
    %12 = vsyncpa %s11, 0
    %13 = vsyncpa [#allocation6], 0
    %s14 = scalar_lea.sflag [#allocation6], 1
    %15 = vsyncpa %s14, 0
    loop: start=0, step=1, limit=14
    $region2: #{tpu_custom_call.1} parent=1 // loop_pre_header
      _
    $region3: #{tpu_custom_call.1} parent=1 // loop_header
      %s17 = sphi 0, %s21
      %p18 = scmp.ge.s32.totalorder %s17, 14
      %s24 = sphi 0, %s36
      %s25 = sphi 0, %s32
      %s26 = sphi 0, %s24
      %s27 = sphi 0, %s25
      %s28 = sphi 0, %s26
      %s29 = sphi 0, %s27
      %s41 = sphi 0, %s43
      %s44 = sphi 0, %s41
      %s45 = sphi 0, %s44
      %s61 = sphi 0, %s45
      %s69 = sphi 0, %s71
      %s72 = sphi 0, %s69
      %s73 = sphi 0, %s72
      %s89 = sphi 0, %s73
      %s95 = sphi 0, %s97
      %s98 = sphi 0, %s95
      %s99 = sphi 0, %s98
      %s115 = sphi 0, %s99
    $region4: #{tpu_custom_call.1} parent=1 // loop_header_branch
      %20 = sbr.rel (%p18) target = $region8
    $region5: #{tpu_custom_call.1} parent=1 // loop_body
      %s22 = ssub.s32 %s17, 1
      %s23 = ssub.s32 %s17, 2
      %s30 = sadd.s32 1, %s25
      %p31 = scmp.ge.s32.totalorder %s30, 1
      %s32 = scalar_select %p31, 0, %s30
      %s33 = sadd.s32 1, %s24
      %s34 = scalar_select %p31, %s33, %s24
      %p35 = scmp.ge.s32.totalorder %s34, 12
      %s36 = scalar_select %p35, 0, %s34
      %s37 = ssub.s32 %s25, %s32
      %s38 = ssub.s32 %s24, %s36
      %s39 = sor.u32 %s37, %s38
      %p40 = scmp.eq.s32.totalorder %s39, 0
      %s42 = sadd.s32 %s41, 1
      %s43 = scalar_select %p40, %s41, %s42
      %p46 = pneg %p40
      %p47 = scmp.eq.s32.totalorder %s17, 11
      %p48 = por %p46, %p47
      %p49 = scmp.ne.s32.totalorder %s41, %s44
      %p50 = scmp.eq.s32.totalorder %s17, 0
      %p51 = por %p49, %p50
      %p52 = scmp.ne.s32.totalorder %s41, %s44
      %p53 = scmp.eq.s32.totalorder %s22, 11
      %p54 = por %p52, %p53
      %p55 = scmp.ne.s32.totalorder %s44, %s45
      %p56 = scmp.eq.s32.totalorder %s22, 0
      %p57 = por %p55, %p56
      %p58 = scmp.ne.s32.totalorder %s44, %s45
      %p59 = scmp.eq.s32.totalorder %s23, 11
      %p60 = por %p58, %p59
      %p62 = scmp.ne.s32.totalorder %s45, %s61
      %p63 = scmp.eq.s32.totalorder %s23, 0
      %p64 = por %p62, %p63
      %s65 = ssub.s32 %s25, %s32
      %s66 = ssub.s32 %s24, %s36
      %s67 = sor.u32 %s65, %s66
      %p68 = scmp.eq.s32.totalorder %s67, 0
      %s70 = sadd.s32 %s69, 1
      %s71 = scalar_select %p68, %s69, %s70
      %p74 = pneg %p68
      %p75 = scmp.eq.s32.totalorder %s17, 11
      %p76 = por %p74, %p75
      %p77 = scmp.ne.s32.totalorder %s69, %s72
      %p78 = scmp.eq.s32.totalorder %s17, 0
      %p79 = por %p77, %p78
      %p80 = scmp.ne.s32.totalorder %s69, %s72
      %p81 = scmp.eq.s32.totalorder %s22, 11
      %p82 = por %p80, %p81
      %p83 = scmp.ne.s32.totalorder %s72, %s73
      %p84 = scmp.eq.s32.totalorder %s22, 0
      %p85 = por %p83, %p84
      %p86 = scmp.ne.s32.totalorder %s72, %s73
      %p87 = scmp.eq.s32.totalorder %s23, 11
      %p88 = por %p86, %p87
      %p90 = scmp.ne.s32.totalorder %s73, %s89
      %p91 = scmp.eq.s32.totalorder %s23, 0
      %p92 = por %p90, %p91
      %s93 = ssub.s32 %s24, %s36
      %p94 = scmp.eq.s32.totalorder %s93, 0
      %s96 = sadd.s32 %s95, 1
      %s97 = scalar_select %p94, %s95, %s96
      %p100 = pneg %p94
      %p101 = scmp.eq.s32.totalorder %s17, 11
      %p102 = por %p100, %p101
      %p103 = scmp.ne.s32.totalorder %s95, %s98
      %p104 = scmp.eq.s32.totalorder %s17, 0
      %p105 = por %p103, %p104
      %p106 = scmp.ne.s32.totalorder %s95, %s98
      %p107 = scmp.eq.s32.totalorder %s22, 11
      %p108 = por %p106, %p107
      %p109 = scmp.ne.s32.totalorder %s98, %s99
      %p110 = scmp.eq.s32.totalorder %s22, 0
      %p111 = por %p109, %p110
      %p112 = scmp.ne.s32.totalorder %s98, %s99
      %p113 = scmp.eq.s32.totalorder %s23, 11
      %p114 = por %p112, %p113
      %p116 = scmp.ne.s32.totalorder %s99, %s115
      %p117 = scmp.eq.s32.totalorder %s23, 0
      %p118 = por %p116, %p117
      %p119 = scmp.le.s32.totalorder 1, %s17
      %p120 = scmp.lt.s32.totalorder %s17, 13
      %p121 = pnand %p119, %p120
      %p122 = pneg %p121
      // Predicated region
      $region9: #{tpu_custom_call.1} parent=5 // pred_check
        _
      $region10: #{tpu_custom_call.1} parent=5 // pred_check_branch
        %124 = sbr.rel (%p121) target = $region12
      $region11: #{tpu_custom_call.1} parent=5 // pred_region
        %s125 = ssub.s32 %s17, 1
      $region12: #{tpu_custom_call.1} parent=5 // pred_fallthru
        _
      %p126 = scmp.lt.s32.totalorder %s17, 12
      // Predicated region
      $region13: #{tpu_custom_call.1} parent=5 // pred_check
        %p127 = pneg %p126
      $region14: #{tpu_custom_call.1} parent=5 // pred_check_branch
        %129 = sbr.rel (%p127) target = $region16
      $region15: #{tpu_custom_call.1} parent=5 // pred_region
        // Predicated region
        $region17: #{tpu_custom_call.1} parent=15 // pred_check
          %p130 = pneg %p51
        $region18: #{tpu_custom_call.1} parent=15 // pred_check_branch
          %132 = sbr.rel (%p130) target = $region20
        $region19: #{tpu_custom_call.1} parent=15 // pred_region
          %s133 = sand.u32 %s41, 1
          %s134 = scalar_lea.sflag [#allocation5], %s133
          %s135 = sand.u32 %s41, 1
          %s136 = smul.addr %s135, 1024
          %s137 = scalar_lea.vmem [#allocation4], %s136
          %s138 = smul.u32 2, %s25
          %s139 = smul.u32 16, %s24
          %s141 = ssub.s32 16384, 16384
          %142 = vsyncadd %s134, %s141
          %s143 = smul.addr %s138, 192
          %s144 = sadd.s32 %s139, %s143
          %s145 = smul.addr %s144, 128
          %s146 = scalar_lea.hbm %s0, %s145
          %s147 = sshll.u32 %s137, 4
          %s148 = int_to_ptr.vmem [resolvable:$true] %s147
          %153 = dma.hbm_to_vmem [thread:$0]  %s146, 16384, %s148, %s134, 24576, 2048, 128
        $region20: #{tpu_custom_call.1} parent=15 // pred_fallthru
          _
        // Predicated region
        $region21: #{tpu_custom_call.1} parent=15 // pred_check
          %p154 = pneg %p79
        $region22: #{tpu_custom_call.1} parent=15 // pred_check_branch
          %156 = sbr.rel (%p154) target = $region24
        $region23: #{tpu_custom_call.1} parent=15 // pred_region
          %s157 = sand.u32 %s69, 1
          %s158 = scalar_lea.sflag [#allocation8], %s157
          %s159 = sand.u32 %s69, 1
          %s160 = smul.addr %s159, 1024
          %s161 = scalar_lea.vmem [#allocation7], %s160
          %s162 = smul.u32 2, %s25
          %s163 = smul.u32 16, %s24
          %s165 = ssub.s32 16384, 16384
          %166 = vsyncadd %s158, %s165
          %s167 = smul.addr %s162, 192
          %s168 = sadd.s32 %s163, %s167
          %s169 = smul.addr %s168, 128
          %s170 = scalar_lea.hbm %s1, %s169
          %s171 = sshll.u32 %s161, 4
          %s172 = int_to_ptr.vmem [resolvable:$true] %s171
          %177 = dma.hbm_to_vmem [thread:$0]  %s170, 16384, %s172, %s158, 24576, 2048, 128
        $region24: #{tpu_custom_call.1} parent=15 // pred_fallthru
          _
      $region16: #{tpu_custom_call.1} parent=5 // pred_fallthru
        _
      %p178 = scmp.le.s32.totalorder 1, %s17
      %p179 = scmp.lt.s32.totalorder %s17, 13
      %p180 = pnand %p178, %p179
      %p181 = pneg %p180
      // Predicated region
      $region25: #{tpu_custom_call.1} parent=5 // pred_check
        _
      $region26: #{tpu_custom_call.1} parent=5 // pred_check_branch
        %183 = sbr.rel (%p180) target = $region28
      $region27: #{tpu_custom_call.1} parent=5 // pred_region
        %s184 = ssub.s32 %s17, 1
        %s185 = sand.u32 %s44, 1
        %s186 = scalar_lea.sflag [#allocation5], %s185
        %s187 = sand.u32 %s44, 1
        %s188 = smul.addr %s187, 1024
        %s189 = scalar_lea.vmem [#allocation4], %s188
        // Predicated region
        $region29: #{tpu_custom_call.1} parent=27 // pred_check
          %p190 = pneg %p57
        $region30: #{tpu_custom_call.1} parent=27 // pred_check_branch
          %192 = sbr.rel (%p190) target = $region32
        $region31: #{tpu_custom_call.1} parent=27 // pred_region
          %193 = dma.done %s186, 16384
        $region32: #{tpu_custom_call.1} parent=27 // pred_fallthru
          _
        %s194 = sand.u32 %s72, 1
        %s195 = scalar_lea.sflag [#allocation8], %s194
        %s196 = sand.u32 %s72, 1
        %s197 = smul.addr %s196, 1024
        %s198 = scalar_lea.vmem [#allocation7], %s197
        // Predicated region
        $region33: #{tpu_custom_call.1} parent=27 // pred_check
          %p199 = pneg %p85
        $region34: #{tpu_custom_call.1} parent=27 // pred_check_branch
          %201 = sbr.rel (%p199) target = $region36
        $region35: #{tpu_custom_call.1} parent=27 // pred_region
          %202 = dma.done %s195, 16384
        $region36: #{tpu_custom_call.1} parent=27 // pred_fallthru
          _
        %s203 = sand.u32 %s44, 1
        %s204 = scalar_lea.sflag [#allocation5], %s203
        %s205 = sand.u32 %s44, 1
        %s206 = smul.addr %s205, 1024
        %s207 = scalar_lea.vmem [#allocation4], %s206
        %p208 = pneg %p57
        %p209 = pneg %p54
        %s210 = sand.u32 %s72, 1
        %s211 = scalar_lea.sflag [#allocation8], %s210
        %s212 = sand.u32 %s72, 1
        %s213 = smul.addr %s212, 1024
        %s214 = scalar_lea.vmem [#allocation7], %s213
        %p215 = pneg %p85
        %p216 = pneg %p82
        %p217 = pneg %p111
        %p218 = pneg %p108
        %s219 = sand.u32 %s98, 1
        %s220 = scalar_lea.sflag [#allocation6], %s219
        %s221 = sand.u32 %s98, 1
        %s222 = smul.addr %s221, 64
        %s223 = scalar_lea.vmem [#allocation9], %s222
        %s224 = smul.u32 2, %s27
        %s225 = smul.u32 16, %s26
        %s226 = smul.u32 2, %s27
        %s227 = smul.u32 16, %s26
        %s228 = smul.u32 16, %s26
        %p229 = scmp.eq.s32.totalorder %s27, 0
        // Predicated region
        $region37: #{tpu_custom_call.1} parent=27 // pred_check
          %p230 = pneg %p229
        $region38: #{tpu_custom_call.1} parent=27 // pred_check_branch
          %232 = sbr.rel (%p230) target = $region40
        $region39: #{tpu_custom_call.1} parent=27 // pred_region
          %233 = vst [vmem:[#allocation2] sm:$0xff] 0.0
          %234 = vst [vmem:[#allocation2 + $0x8] sm:$0xff] 0.0
          %235 = vst [vmem:[#allocation2 + $0x10] sm:$0xff] 0.0
          %236 = vst [vmem:[#allocation2 + $0x18] sm:$0xff] 0.0
          %237 = vst [vmem:[#allocation2 + $0x20] sm:$0xff] 0.0
          %238 = vst [vmem:[#allocation2 + $0x28] sm:$0xff] 0.0
          %239 = vst [vmem:[#allocation2 + $0x30] sm:$0xff] 0.0
          %240 = vst [vmem:[#allocation2 + $0x38] sm:$0xff] 0.0
          %241 = vst [vmem:[#allocation3] sm:$0xff] 0.0
          %242 = vst [vmem:[#allocation3 + $0x8] sm:$0xff] 0.0
          %243 = vst [vmem:[#allocation3 + $0x10] sm:$0xff] 0.0
          %244 = vst [vmem:[#allocation3 + $0x18] sm:$0xff] 0.0
          %245 = vst [vmem:[#allocation3 + $0x20] sm:$0xff] 0.0
          %246 = vst [vmem:[#allocation3 + $0x28] sm:$0xff] 0.0
          %247 = vst [vmem:[#allocation3 + $0x30] sm:$0xff] 0.0
          %248 = vst [vmem:[#allocation3 + $0x38] sm:$0xff] 0.0
        $region40: #{tpu_custom_call.1} parent=27 // pred_fallthru
          _
        %v249 = vld [vmem:[%s189] sm:$0xff]
        %v250 = vld [vmem:[%s189 + $0x8] sm:$0xff]
        %v251 = vld [vmem:[%s189 + $0x10] sm:$0xff]
        %v252 = vld [vmem:[%s189 + $0x18] sm:$0xff]
        %v253 = vld [vmem:[%s189 + $0x20] sm:$0xff]
        %v254 = vld [vmem:[%s189 + $0x28] sm:$0xff]
        %v255 = vld [vmem:[%s189 + $0x30] sm:$0xff]
        %v256 = vld [vmem:[%s189 + $0x38] sm:$0xff]
        %v257 = vld [vmem:[%s189 + $0x40] sm:$0xff]
        %v258 = vld [vmem:[%s189 + $0x48] sm:$0xff]
        %v259 = vld [vmem:[%s189 + $0x50] sm:$0xff]
        %v260 = vld [vmem:[%s189 + $0x58] sm:$0xff]
        %v261 = vld [vmem:[%s189 + $0x60] sm:$0xff]
        %v262 = vld [vmem:[%s189 + $0x68] sm:$0xff]
        %v263 = vld [vmem:[%s189 + $0x70] sm:$0xff]
        %v264 = vld [vmem:[%s189 + $0x78] sm:$0xff]
        %v265 = vld [vmem:[%s189 + $0x80] sm:$0xff]
        %v266 = vld [vmem:[%s189 + $0x88] sm:$0xff]
        %v267 = vld [vmem:[%s189 + $0x90] sm:$0xff]
        %v268 = vld [vmem:[%s189 + $0x98] sm:$0xff]
        %v269 = vld [vmem:[%s189 + $0xa0] sm:$0xff]
        %v270 = vld [vmem:[%s189 + $0xa8] sm:$0xff]
        %v271 = vld [vmem:[%s189 + $0xb0] sm:$0xff]
        %v272 = vld [vmem:[%s189 + $0xb8] sm:$0xff]
        %v273 = vld [vmem:[%s189 + $0xc0] sm:$0xff]
        %v274 = vld [vmem:[%s189 + $0xc8] sm:$0xff]
        %v275 = vld [vmem:[%s189 + $0xd0] sm:$0xff]
        %v276 = vld [vmem:[%s189 + $0xd8] sm:$0xff]
        %v277 = vld [vmem:[%s189 + $0xe0] sm:$0xff]
        %v278 = vld [vmem:[%s189 + $0xe8] sm:$0xff]
        %v279 = vld [vmem:[%s189 + $0xf0] sm:$0xff]
        %v280 = vld [vmem:[%s189 + $0xf8] sm:$0xff]
        %v281 = vld [vmem:[%s189 + $0x100] sm:$0xff]
        %v282 = vld [vmem:[%s189 + $0x108] sm:$0xff]
        %v283 = vld [vmem:[%s189 + $0x110] sm:$0xff]
        %v284 = vld [vmem:[%s189 + $0x118] sm:$0xff]
        %v285 = vld [vmem:[%s189 + $0x120] sm:$0xff]
        %v286 = vld [vmem:[%s189 + $0x128] sm:$0xff]
        %v287 = vld [vmem:[%s189 + $0x130] sm:$0xff]
        %v288 = vld [vmem:[%s189 + $0x138] sm:$0xff]
        %v289 = vld [vmem:[%s189 + $0x140] sm:$0xff]
        %v290 = vld [vmem:[%s189 + $0x148] sm:$0xff]
        %v291 = vld [vmem:[%s189 + $0x150] sm:$0xff]
        %v292 = vld [vmem:[%s189 + $0x158] sm:$0xff]
        %v293 = vld [vmem:[%s189 + $0x160] sm:$0xff]
        %v294 = vld [vmem:[%s189 + $0x168] sm:$0xff]
        %v295 = vld [vmem:[%s189 + $0x170] sm:$0xff]
        %v296 = vld [vmem:[%s189 + $0x178] sm:$0xff]
        %v297 = vld [vmem:[%s189 + $0x180] sm:$0xff]
        %v298 = vld [vmem:[%s189 + $0x188] sm:$0xff]
        %v299 = vld [vmem:[%s189 + $0x190] sm:$0xff]
        %v300 = vld [vmem:[%s189 + $0x198] sm:$0xff]
        %v301 = vld [vmem:[%s189 + $0x1a0] sm:$0xff]
        %v302 = vld [vmem:[%s189 + $0x1a8] sm:$0xff]
        %v303 = vld [vmem:[%s189 + $0x1b0] sm:$0xff]
        %v304 = vld [vmem:[%s189 + $0x1b8] sm:$0xff]
        %v305 = vld [vmem:[%s189 + $0x1c0] sm:$0xff]
        %v306 = vld [vmem:[%s189 + $0x1c8] sm:$0xff]
        %v307 = vld [vmem:[%s189 + $0x1d0] sm:$0xff]
        %v308 = vld [vmem:[%s189 + $0x1d8] sm:$0xff]
        %v309 = vld [vmem:[%s189 + $0x1e0] sm:$0xff]
        %v310 = vld [vmem:[%s189 + $0x1e8] sm:$0xff]
        %v311 = vld [vmem:[%s189 + $0x1f0] sm:$0xff]
        %v312 = vld [vmem:[%s189 + $0x1f8] sm:$0xff]
        %v313 = vld [vmem:[%s189 + $0x200] sm:$0xff]
        %v314 = vld [vmem:[%s189 + $0x208] sm:$0xff]
        %v315 = vld [vmem:[%s189 + $0x210] sm:$0xff]
        %v316 = vld [vmem:[%s189 + $0x218] sm:$0xff]
        %v317 = vld [vmem:[%s189 + $0x220] sm:$0xff]
        %v318 = vld [vmem:[%s189 + $0x228] sm:$0xff]
        %v319 = vld [vmem:[%s189 + $0x230] sm:$0xff]
        %v320 = vld [vmem:[%s189 + $0x238] sm:$0xff]
        %v321 = vld [vmem:[%s189 + $0x240] sm:$0xff]
        %v322 = vld [vmem:[%s189 + $0x248] sm:$0xff]
        %v323 = vld [vmem:[%s189 + $0x250] sm:$0xff]
        %v324 = vld [vmem:[%s189 + $0x258] sm:$0xff]
        %v325 = vld [vmem:[%s189 + $0x260] sm:$0xff]
        %v326 = vld [vmem:[%s189 + $0x268] sm:$0xff]
        %v327 = vld [vmem:[%s189 + $0x270] sm:$0xff]
        %v328 = vld [vmem:[%s189 + $0x278] sm:$0xff]
        %v329 = vld [vmem:[%s189 + $0x280] sm:$0xff]
        %v330 = vld [vmem:[%s189 + $0x288] sm:$0xff]
        %v331 = vld [vmem:[%s189 + $0x290] sm:$0xff]
        %v332 = vld [vmem:[%s189 + $0x298] sm:$0xff]
        %v333 = vld [vmem:[%s189 + $0x2a0] sm:$0xff]
        %v334 = vld [vmem:[%s189 + $0x2a8] sm:$0xff]
        %v335 = vld [vmem:[%s189 + $0x2b0] sm:$0xff]
        %v336 = vld [vmem:[%s189 + $0x2b8] sm:$0xff]
        %v337 = vld [vmem:[%s189 + $0x2c0] sm:$0xff]
        %v338 = vld [vmem:[%s189 + $0x2c8] sm:$0xff]
        %v339 = vld [vmem:[%s189 + $0x2d0] sm:$0xff]
        %v340 = vld [vmem:[%s189 + $0x2d8] sm:$0xff]
        %v341 = vld [vmem:[%s189 + $0x2e0] sm:$0xff]
        %v342 = vld [vmem:[%s189 + $0x2e8] sm:$0xff]
        %v343 = vld [vmem:[%s189 + $0x2f0] sm:$0xff]
        %v344 = vld [vmem:[%s189 + $0x2f8] sm:$0xff]
        %v345 = vld [vmem:[%s189 + $0x300] sm:$0xff]
        %v346 = vld [vmem:[%s189 + $0x308] sm:$0xff]
        %v347 = vld [vmem:[%s189 + $0x310] sm:$0xff]
        %v348 = vld [vmem:[%s189 + $0x318] sm:$0xff]
        %v349 = vld [vmem:[%s189 + $0x320] sm:$0xff]
        %v350 = vld [vmem:[%s189 + $0x328] sm:$0xff]
        %v351 = vld [vmem:[%s189 + $0x330] sm:$0xff]
        %v352 = vld [vmem:[%s189 + $0x338] sm:$0xff]
        %v353 = vld [vmem:[%s189 + $0x340] sm:$0xff]
        %v354 = vld [vmem:[%s189 + $0x348] sm:$0xff]
        %v355 = vld [vmem:[%s189 + $0x350] sm:$0xff]
        %v356 = vld [vmem:[%s189 + $0x358] sm:$0xff]
        %v357 = vld [vmem:[%s189 + $0x360] sm:$0xff]
        %v358 = vld [vmem:[%s189 + $0x368] sm:$0xff]
        %v359 = vld [vmem:[%s189 + $0x370] sm:$0xff]
        %v360 = vld [vmem:[%s189 + $0x378] sm:$0xff]
        %v361 = vld [vmem:[%s189 + $0x380] sm:$0xff]
        %v362 = vld [vmem:[%s189 + $0x388] sm:$0xff]
        %v363 = vld [vmem:[%s189 + $0x390] sm:$0xff]
        %v364 = vld [vmem:[%s189 + $0x398] sm:$0xff]
        %v365 = vld [vmem:[%s189 + $0x3a0] sm:$0xff]
        %v366 = vld [vmem:[%s189 + $0x3a8] sm:$0xff]
        %v367 = vld [vmem:[%s189 + $0x3b0] sm:$0xff]
        %v368 = vld [vmem:[%s189 + $0x3b8] sm:$0xff]
        %v369 = vld [vmem:[%s189 + $0x3c0] sm:$0xff]
        %v370 = vld [vmem:[%s189 + $0x3c8] sm:$0xff]
        %v371 = vld [vmem:[%s189 + $0x3d0] sm:$0xff]
        %v372 = vld [vmem:[%s189 + $0x3d8] sm:$0xff]
        %v373 = vld [vmem:[%s189 + $0x3e0] sm:$0xff]
        %v374 = vld [vmem:[%s189 + $0x3e8] sm:$0xff]
        %v375 = vld [vmem:[%s189 + $0x3f0] sm:$0xff]
        %v376 = vld [vmem:[%s189 + $0x3f8] sm:$0xff]
        %v377 = vmax.f32 %v249, 0.0
        %v378 = vmax.f32 %v250, 0.0
        %v379 = vmax.f32 %v251, 0.0
        %v380 = vmax.f32 %v252, 0.0
        %v381 = vmax.f32 %v253, 0.0
        %v382 = vmax.f32 %v254, 0.0
        %v383 = vmax.f32 %v255, 0.0
        %v384 = vmax.f32 %v256, 0.0
        %v385 = vmax.f32 %v257, 0.0
        %v386 = vmax.f32 %v258, 0.0
        %v387 = vmax.f32 %v259, 0.0
        %v388 = vmax.f32 %v260, 0.0
        %v389 = vmax.f32 %v261, 0.0
        %v390 = vmax.f32 %v262, 0.0
        %v391 = vmax.f32 %v263, 0.0
        %v392 = vmax.f32 %v264, 0.0
        %v393 = vmax.f32 %v265, 0.0
        %v394 = vmax.f32 %v266, 0.0
        %v395 = vmax.f32 %v267, 0.0
        %v396 = vmax.f32 %v268, 0.0
        %v397 = vmax.f32 %v269, 0.0
        %v398 = vmax.f32 %v270, 0.0
        %v399 = vmax.f32 %v271, 0.0
        %v400 = vmax.f32 %v272, 0.0
        %v401 = vmax.f32 %v273, 0.0
        %v402 = vmax.f32 %v274, 0.0
        %v403 = vmax.f32 %v275, 0.0
        %v404 = vmax.f32 %v276, 0.0
        %v405 = vmax.f32 %v277, 0.0
        %v406 = vmax.f32 %v278, 0.0
        %v407 = vmax.f32 %v279, 0.0
        %v408 = vmax.f32 %v280, 0.0
        %v409 = vmax.f32 %v281, 0.0
        %v410 = vmax.f32 %v282, 0.0
        %v411 = vmax.f32 %v283, 0.0
        %v412 = vmax.f32 %v284, 0.0
        %v413 = vmax.f32 %v285, 0.0
        %v414 = vmax.f32 %v286, 0.0
        %v415 = vmax.f32 %v287, 0.0
        %v416 = vmax.f32 %v288, 0.0
        %v417 = vmax.f32 %v289, 0.0
        %v418 = vmax.f32 %v290, 0.0
        %v419 = vmax.f32 %v291, 0.0
        %v420 = vmax.f32 %v292, 0.0
        %v421 = vmax.f32 %v293, 0.0
        %v422 = vmax.f32 %v294, 0.0
        %v423 = vmax.f32 %v295, 0.0
        %v424 = vmax.f32 %v296, 0.0
        %v425 = vmax.f32 %v297, 0.0
        %v426 = vmax.f32 %v298, 0.0
        %v427 = vmax.f32 %v299, 0.0
        %v428 = vmax.f32 %v300, 0.0
        %v429 = vmax.f32 %v301, 0.0
        %v430 = vmax.f32 %v302, 0.0
        %v431 = vmax.f32 %v303, 0.0
        %v432 = vmax.f32 %v304, 0.0
        %v433 = vmax.f32 %v305, 0.0
        %v434 = vmax.f32 %v306, 0.0
        %v435 = vmax.f32 %v307, 0.0
        %v436 = vmax.f32 %v308, 0.0
        %v437 = vmax.f32 %v309, 0.0
        %v438 = vmax.f32 %v310, 0.0
        %v439 = vmax.f32 %v311, 0.0
        %v440 = vmax.f32 %v312, 0.0
        %v441 = vmax.f32 %v313, 0.0
        %v442 = vmax.f32 %v314, 0.0
        %v443 = vmax.f32 %v315, 0.0
        %v444 = vmax.f32 %v316, 0.0
        %v445 = vmax.f32 %v317, 0.0
        %v446 = vmax.f32 %v318, 0.0
        %v447 = vmax.f32 %v319, 0.0
        %v448 = vmax.f32 %v320, 0.0
        %v449 = vmax.f32 %v321, 0.0
        %v450 = vmax.f32 %v322, 0.0
        %v451 = vmax.f32 %v323, 0.0
        %v452 = vmax.f32 %v324, 0.0
        %v453 = vmax.f32 %v325, 0.0
        %v454 = vmax.f32 %v326, 0.0
        %v455 = vmax.f32 %v327, 0.0
        %v456 = vmax.f32 %v328, 0.0
        %v457 = vmax.f32 %v329, 0.0
        %v458 = vmax.f32 %v330, 0.0
        %v459 = vmax.f32 %v331, 0.0
        %v460 = vmax.f32 %v332, 0.0
        %v461 = vmax.f32 %v333, 0.0
        %v462 = vmax.f32 %v334, 0.0
        %v463 = vmax.f32 %v335, 0.0
        %v464 = vmax.f32 %v336, 0.0
        %v465 = vmax.f32 %v337, 0.0
        %v466 = vmax.f32 %v338, 0.0
        %v467 = vmax.f32 %v339, 0.0
        %v468 = vmax.f32 %v340, 0.0
        %v469 = vmax.f32 %v341, 0.0
        %v470 = vmax.f32 %v342, 0.0
        %v471 = vmax.f32 %v343, 0.0
        %v472 = vmax.f32 %v344, 0.0
        %v473 = vmax.f32 %v345, 0.0
        %v474 = vmax.f32 %v346, 0.0
        %v475 = vmax.f32 %v347, 0.0
        %v476 = vmax.f32 %v348, 0.0
        %v477 = vmax.f32 %v349, 0.0
        %v478 = vmax.f32 %v350, 0.0
        %v479 = vmax.f32 %v351, 0.0
        %v480 = vmax.f32 %v352, 0.0
        %v481 = vmax.f32 %v353, 0.0
        %v482 = vmax.f32 %v354, 0.0
        %v483 = vmax.f32 %v355, 0.0
        %v484 = vmax.f32 %v356, 0.0
        %v485 = vmax.f32 %v357, 0.0
        %v486 = vmax.f32 %v358, 0.0
        %v487 = vmax.f32 %v359, 0.0
        %v488 = vmax.f32 %v360, 0.0
        %v489 = vmax.f32 %v361, 0.0
        %v490 = vmax.f32 %v362, 0.0
        %v491 = vmax.f32 %v363, 0.0
        %v492 = vmax.f32 %v364, 0.0
        %v493 = vmax.f32 %v365, 0.0
        %v494 = vmax.f32 %v366, 0.0
        %v495 = vmax.f32 %v367, 0.0
        %v496 = vmax.f32 %v368, 0.0
        %v497 = vmax.f32 %v369, 0.0
        %v498 = vmax.f32 %v370, 0.0
        %v499 = vmax.f32 %v371, 0.0
        %v500 = vmax.f32 %v372, 0.0
        %v501 = vmax.f32 %v373, 0.0
        %v502 = vmax.f32 %v374, 0.0
        %v503 = vmax.f32 %v375, 0.0
        %v504 = vmax.f32 %v376, 0.0
        %v505 = vmin.f32 %v377, 1.0
        %v506 = vmin.f32 %v378, 1.0
        %v507 = vmin.f32 %v379, 1.0
        %v508 = vmin.f32 %v380, 1.0
        %v509 = vmin.f32 %v381, 1.0
        %v510 = vmin.f32 %v382, 1.0
        %v511 = vmin.f32 %v383, 1.0
        %v512 = vmin.f32 %v384, 1.0
        %v513 = vmin.f32 %v385, 1.0
        %v514 = vmin.f32 %v386, 1.0
        %v515 = vmin.f32 %v387, 1.0
        %v516 = vmin.f32 %v388, 1.0
        %v517 = vmin.f32 %v389, 1.0
        %v518 = vmin.f32 %v390, 1.0
        %v519 = vmin.f32 %v391, 1.0
        %v520 = vmin.f32 %v392, 1.0
        %v521 = vmin.f32 %v393, 1.0
        %v522 = vmin.f32 %v394, 1.0
        %v523 = vmin.f32 %v395, 1.0
        %v524 = vmin.f32 %v396, 1.0
        %v525 = vmin.f32 %v397, 1.0
        %v526 = vmin.f32 %v398, 1.0
        %v527 = vmin.f32 %v399, 1.0
        %v528 = vmin.f32 %v400, 1.0
        %v529 = vmin.f32 %v401, 1.0
        %v530 = vmin.f32 %v402, 1.0
        %v531 = vmin.f32 %v403, 1.0
        %v532 = vmin.f32 %v404, 1.0
        %v533 = vmin.f32 %v405, 1.0
        %v534 = vmin.f32 %v406, 1.0
        %v535 = vmin.f32 %v407, 1.0
        %v536 = vmin.f32 %v408, 1.0
        %v537 = vmin.f32 %v409, 1.0
        %v538 = vmin.f32 %v410, 1.0
        %v539 = vmin.f32 %v411, 1.0
        %v540 = vmin.f32 %v412, 1.0
        %v541 = vmin.f32 %v413, 1.0
        %v542 = vmin.f32 %v414, 1.0
        %v543 = vmin.f32 %v415, 1.0
        %v544 = vmin.f32 %v416, 1.0
        %v545 = vmin.f32 %v417, 1.0
        %v546 = vmin.f32 %v418, 1.0
        %v547 = vmin.f32 %v419, 1.0
        %v548 = vmin.f32 %v420, 1.0
        %v549 = vmin.f32 %v421, 1.0
        %v550 = vmin.f32 %v422, 1.0
        %v551 = vmin.f32 %v423, 1.0
        %v552 = vmin.f32 %v424, 1.0
        %v553 = vmin.f32 %v425, 1.0
        %v554 = vmin.f32 %v426, 1.0
        %v555 = vmin.f32 %v427, 1.0
        %v556 = vmin.f32 %v428, 1.0
        %v557 = vmin.f32 %v429, 1.0
        %v558 = vmin.f32 %v430, 1.0
        %v559 = vmin.f32 %v431, 1.0
        %v560 = vmin.f32 %v432, 1.0
        %v561 = vmin.f32 %v433, 1.0
        %v562 = vmin.f32 %v434, 1.0
        %v563 = vmin.f32 %v435, 1.0
        %v564 = vmin.f32 %v436, 1.0
        %v565 = vmin.f32 %v437, 1.0
        %v566 = vmin.f32 %v438, 1.0
        %v567 = vmin.f32 %v439, 1.0
        %v568 = vmin.f32 %v440, 1.0
        %v569 = vmin.f32 %v441, 1.0
        %v570 = vmin.f32 %v442, 1.0
        %v571 = vmin.f32 %v443, 1.0
        %v572 = vmin.f32 %v444, 1.0
        %v573 = vmin.f32 %v445, 1.0
        %v574 = vmin.f32 %v446, 1.0
        %v575 = vmin.f32 %v447, 1.0
        %v576 = vmin.f32 %v448, 1.0
        %v577 = vmin.f32 %v449, 1.0
        %v578 = vmin.f32 %v450, 1.0
        %v579 = vmin.f32 %v451, 1.0
        %v580 = vmin.f32 %v452, 1.0
        %v581 = vmin.f32 %v453, 1.0
        %v582 = vmin.f32 %v454, 1.0
        %v583 = vmin.f32 %v455, 1.0
        %v584 = vmin.f32 %v456, 1.0
        %v585 = vmin.f32 %v457, 1.0
        %v586 = vmin.f32 %v458, 1.0
        %v587 = vmin.f32 %v459, 1.0
        %v588 = vmin.f32 %v460, 1.0
        %v589 = vmin.f32 %v461, 1.0
        %v590 = vmin.f32 %v462, 1.0
        %v591 = vmin.f32 %v463, 1.0
        %v592 = vmin.f32 %v464, 1.0
        %v593 = vmin.f32 %v465, 1.0
        %v594 = vmin.f32 %v466, 1.0
        %v595 = vmin.f32 %v467, 1.0
        %v596 = vmin.f32 %v468, 1.0
        %v597 = vmin.f32 %v469, 1.0
        %v598 = vmin.f32 %v470, 1.0
        %v599 = vmin.f32 %v471, 1.0
        %v600 = vmin.f32 %v472, 1.0
        %v601 = vmin.f32 %v473, 1.0
        %v602 = vmin.f32 %v474, 1.0
        %v603 = vmin.f32 %v475, 1.0
        %v604 = vmin.f32 %v476, 1.0
        %v605 = vmin.f32 %v477, 1.0
        %v606 = vmin.f32 %v478, 1.0
        %v607 = vmin.f32 %v479, 1.0
        %v608 = vmin.f32 %v480, 1.0
        %v609 = vmin.f32 %v481, 1.0
        %v610 = vmin.f32 %v482, 1.0
        %v611 = vmin.f32 %v483, 1.0
        %v612 = vmin.f32 %v484, 1.0
        %v613 = vmin.f32 %v485, 1.0
        %v614 = vmin.f32 %v486, 1.0
        %v615 = vmin.f32 %v487, 1.0
        %v616 = vmin.f32 %v488, 1.0
        %v617 = vmin.f32 %v489, 1.0
        %v618 = vmin.f32 %v490, 1.0
        %v619 = vmin.f32 %v491, 1.0
        %v620 = vmin.f32 %v492, 1.0
        %v621 = vmin.f32 %v493, 1.0
        %v622 = vmin.f32 %v494, 1.0
        %v623 = vmin.f32 %v495, 1.0
        %v624 = vmin.f32 %v496, 1.0
        %v625 = vmin.f32 %v497, 1.0
        %v626 = vmin.f32 %v498, 1.0
        %v627 = vmin.f32 %v499, 1.0
        %v628 = vmin.f32 %v500, 1.0
        %v629 = vmin.f32 %v501, 1.0
        %v630 = vmin.f32 %v502, 1.0
        %v631 = vmin.f32 %v503, 1.0
        %v632 = vmin.f32 %v504, 1.0
        %v633 = vld [vmem:[%s198] sm:$0xff]
        %v634 = vld [vmem:[%s198 + $0x8] sm:$0xff]
        %v635 = vld [vmem:[%s198 + $0x10] sm:$0xff]
        %v636 = vld [vmem:[%s198 + $0x18] sm:$0xff]
        %v637 = vld [vmem:[%s198 + $0x20] sm:$0xff]
        %v638 = vld [vmem:[%s198 + $0x28] sm:$0xff]
        %v639 = vld [vmem:[%s198 + $0x30] sm:$0xff]
        %v640 = vld [vmem:[%s198 + $0x38] sm:$0xff]
        %v641 = vld [vmem:[%s198 + $0x40] sm:$0xff]
        %v642 = vld [vmem:[%s198 + $0x48] sm:$0xff]
        %v643 = vld [vmem:[%s198 + $0x50] sm:$0xff]
        %v644 = vld [vmem:[%s198 + $0x58] sm:$0xff]
        %v645 = vld [vmem:[%s198 + $0x60] sm:$0xff]
        %v646 = vld [vmem:[%s198 + $0x68] sm:$0xff]
        %v647 = vld [vmem:[%s198 + $0x70] sm:$0xff]
        %v648 = vld [vmem:[%s198 + $0x78] sm:$0xff]
        %v649 = vld [vmem:[%s198 + $0x80] sm:$0xff]
        %v650 = vld [vmem:[%s198 + $0x88] sm:$0xff]
        %v651 = vld [vmem:[%s198 + $0x90] sm:$0xff]
        %v652 = vld [vmem:[%s198 + $0x98] sm:$0xff]
        %v653 = vld [vmem:[%s198 + $0xa0] sm:$0xff]
        %v654 = vld [vmem:[%s198 + $0xa8] sm:$0xff]
        %v655 = vld [vmem:[%s198 + $0xb0] sm:$0xff]
        %v656 = vld [vmem:[%s198 + $0xb8] sm:$0xff]
        %v657 = vld [vmem:[%s198 + $0xc0] sm:$0xff]
        %v658 = vld [vmem:[%s198 + $0xc8] sm:$0xff]
        %v659 = vld [vmem:[%s198 + $0xd0] sm:$0xff]
        %v660 = vld [vmem:[%s198 + $0xd8] sm:$0xff]
        %v661 = vld [vmem:[%s198 + $0xe0] sm:$0xff]
        %v662 = vld [vmem:[%s198 + $0xe8] sm:$0xff]
        %v663 = vld [vmem:[%s198 + $0xf0] sm:$0xff]
        %v664 = vld [vmem:[%s198 + $0xf8] sm:$0xff]
        %v665 = vld [vmem:[%s198 + $0x100] sm:$0xff]
        %v666 = vld [vmem:[%s198 + $0x108] sm:$0xff]
        %v667 = vld [vmem:[%s198 + $0x110] sm:$0xff]
        %v668 = vld [vmem:[%s198 + $0x118] sm:$0xff]
        %v669 = vld [vmem:[%s198 + $0x120] sm:$0xff]
        %v670 = vld [vmem:[%s198 + $0x128] sm:$0xff]
        %v671 = vld [vmem:[%s198 + $0x130] sm:$0xff]
        %v672 = vld [vmem:[%s198 + $0x138] sm:$0xff]
        %v673 = vld [vmem:[%s198 + $0x140] sm:$0xff]
        %v674 = vld [vmem:[%s198 + $0x148] sm:$0xff]
        %v675 = vld [vmem:[%s198 + $0x150] sm:$0xff]
        %v676 = vld [vmem:[%s198 + $0x158] sm:$0xff]
        %v677 = vld [vmem:[%s198 + $0x160] sm:$0xff]
        %v678 = vld [vmem:[%s198 + $0x168] sm:$0xff]
        %v679 = vld [vmem:[%s198 + $0x170] sm:$0xff]
        %v680 = vld [vmem:[%s198 + $0x178] sm:$0xff]
        %v681 = vld [vmem:[%s198 + $0x180] sm:$0xff]
        %v682 = vld [vmem:[%s198 + $0x188] sm:$0xff]
        %v683 = vld [vmem:[%s198 + $0x190] sm:$0xff]
        %v684 = vld [vmem:[%s198 + $0x198] sm:$0xff]
        %v685 = vld [vmem:[%s198 + $0x1a0] sm:$0xff]
        %v686 = vld [vmem:[%s198 + $0x1a8] sm:$0xff]
        %v687 = vld [vmem:[%s198 + $0x1b0] sm:$0xff]
        %v688 = vld [vmem:[%s198 + $0x1b8] sm:$0xff]
        %v689 = vld [vmem:[%s198 + $0x1c0] sm:$0xff]
        %v690 = vld [vmem:[%s198 + $0x1c8] sm:$0xff]
        %v691 = vld [vmem:[%s198 + $0x1d0] sm:$0xff]
        %v692 = vld [vmem:[%s198 + $0x1d8] sm:$0xff]
        %v693 = vld [vmem:[%s198 + $0x1e0] sm:$0xff]
        %v694 = vld [vmem:[%s198 + $0x1e8] sm:$0xff]
        %v695 = vld [vmem:[%s198 + $0x1f0] sm:$0xff]
        %v696 = vld [vmem:[%s198 + $0x1f8] sm:$0xff]
        %v697 = vld [vmem:[%s198 + $0x200] sm:$0xff]
        %v698 = vld [vmem:[%s198 + $0x208] sm:$0xff]
        %v699 = vld [vmem:[%s198 + $0x210] sm:$0xff]
        %v700 = vld [vmem:[%s198 + $0x218] sm:$0xff]
        %v701 = vld [vmem:[%s198 + $0x220] sm:$0xff]
        %v702 = vld [vmem:[%s198 + $0x228] sm:$0xff]
        %v703 = vld [vmem:[%s198 + $0x230] sm:$0xff]
        %v704 = vld [vmem:[%s198 + $0x238] sm:$0xff]
        %v705 = vld [vmem:[%s198 + $0x240] sm:$0xff]
        %v706 = vld [vmem:[%s198 + $0x248] sm:$0xff]
        %v707 = vld [vmem:[%s198 + $0x250] sm:$0xff]
        %v708 = vld [vmem:[%s198 + $0x258] sm:$0xff]
        %v709 = vld [vmem:[%s198 + $0x260] sm:$0xff]
        %v710 = vld [vmem:[%s198 + $0x268] sm:$0xff]
        %v711 = vld [vmem:[%s198 + $0x270] sm:$0xff]
        %v712 = vld [vmem:[%s198 + $0x278] sm:$0xff]
        %v713 = vld [vmem:[%s198 + $0x280] sm:$0xff]
        %v714 = vld [vmem:[%s198 + $0x288] sm:$0xff]
        %v715 = vld [vmem:[%s198 + $0x290] sm:$0xff]
        %v716 = vld [vmem:[%s198 + $0x298] sm:$0xff]
        %v717 = vld [vmem:[%s198 + $0x2a0] sm:$0xff]
        %v718 = vld [vmem:[%s198 + $0x2a8] sm:$0xff]
        %v719 = vld [vmem:[%s198 + $0x2b0] sm:$0xff]
        %v720 = vld [vmem:[%s198 + $0x2b8] sm:$0xff]
        %v721 = vld [vmem:[%s198 + $0x2c0] sm:$0xff]
        %v722 = vld [vmem:[%s198 + $0x2c8] sm:$0xff]
        %v723 = vld [vmem:[%s198 + $0x2d0] sm:$0xff]
        %v724 = vld [vmem:[%s198 + $0x2d8] sm:$0xff]
        %v725 = vld [vmem:[%s198 + $0x2e0] sm:$0xff]
        %v726 = vld [vmem:[%s198 + $0x2e8] sm:$0xff]
        %v727 = vld [vmem:[%s198 + $0x2f0] sm:$0xff]
        %v728 = vld [vmem:[%s198 + $0x2f8] sm:$0xff]
        %v729 = vld [vmem:[%s198 + $0x300] sm:$0xff]
        %v730 = vld [vmem:[%s198 + $0x308] sm:$0xff]
        %v731 = vld [vmem:[%s198 + $0x310] sm:$0xff]
        %v732 = vld [vmem:[%s198 + $0x318] sm:$0xff]
        %v733 = vld [vmem:[%s198 + $0x320] sm:$0xff]
        %v734 = vld [vmem:[%s198 + $0x328] sm:$0xff]
        %v735 = vld [vmem:[%s198 + $0x330] sm:$0xff]
        %v736 = vld [vmem:[%s198 + $0x338] sm:$0xff]
        %v737 = vld [vmem:[%s198 + $0x340] sm:$0xff]
        %v738 = vld [vmem:[%s198 + $0x348] sm:$0xff]
        %v739 = vld [vmem:[%s198 + $0x350] sm:$0xff]
        %v740 = vld [vmem:[%s198 + $0x358] sm:$0xff]
        %v741 = vld [vmem:[%s198 + $0x360] sm:$0xff]
        %v742 = vld [vmem:[%s198 + $0x368] sm:$0xff]
        %v743 = vld [vmem:[%s198 + $0x370] sm:$0xff]
        %v744 = vld [vmem:[%s198 + $0x378] sm:$0xff]
        %v745 = vld [vmem:[%s198 + $0x380] sm:$0xff]
        %v746 = vld [vmem:[%s198 + $0x388] sm:$0xff]
        %v747 = vld [vmem:[%s198 + $0x390] sm:$0xff]
        %v748 = vld [vmem:[%s198 + $0x398] sm:$0xff]
        %v749 = vld [vmem:[%s198 + $0x3a0] sm:$0xff]
        %v750 = vld [vmem:[%s198 + $0x3a8] sm:$0xff]
        %v751 = vld [vmem:[%s198 + $0x3b0] sm:$0xff]
        %v752 = vld [vmem:[%s198 + $0x3b8] sm:$0xff]
        %v753 = vld [vmem:[%s198 + $0x3c0] sm:$0xff]
        %v754 = vld [vmem:[%s198 + $0x3c8] sm:$0xff]
        %v755 = vld [vmem:[%s198 + $0x3d0] sm:$0xff]
        %v756 = vld [vmem:[%s198 + $0x3d8] sm:$0xff]
        %v757 = vld [vmem:[%s198 + $0x3e0] sm:$0xff]
        %v758 = vld [vmem:[%s198 + $0x3e8] sm:$0xff]
        %v759 = vld [vmem:[%s198 + $0x3f0] sm:$0xff]
        %v760 = vld [vmem:[%s198 + $0x3f8] sm:$0xff]
        %v761 = vmax.f32 %v633, 0.0
        %v762 = vmax.f32 %v634, 0.0
        %v763 = vmax.f32 %v635, 0.0
        %v764 = vmax.f32 %v636, 0.0
        %v765 = vmax.f32 %v637, 0.0
        %v766 = vmax.f32 %v638, 0.0
        %v767 = vmax.f32 %v639, 0.0
        %v768 = vmax.f32 %v640, 0.0
        %v769 = vmax.f32 %v641, 0.0
        %v770 = vmax.f32 %v642, 0.0
        %v771 = vmax.f32 %v643, 0.0
        %v772 = vmax.f32 %v644, 0.0
        %v773 = vmax.f32 %v645, 0.0
        %v774 = vmax.f32 %v646, 0.0
        %v775 = vmax.f32 %v647, 0.0
        %v776 = vmax.f32 %v648, 0.0
        %v777 = vmax.f32 %v649, 0.0
        %v778 = vmax.f32 %v650, 0.0
        %v779 = vmax.f32 %v651, 0.0
        %v780 = vmax.f32 %v652, 0.0
        %v781 = vmax.f32 %v653, 0.0
        %v782 = vmax.f32 %v654, 0.0
        %v783 = vmax.f32 %v655, 0.0
        %v784 = vmax.f32 %v656, 0.0
        %v785 = vmax.f32 %v657, 0.0
        %v786 = vmax.f32 %v658, 0.0
        %v787 = vmax.f32 %v659, 0.0
        %v788 = vmax.f32 %v660, 0.0
        %v789 = vmax.f32 %v661, 0.0
        %v790 = vmax.f32 %v662, 0.0
        %v791 = vmax.f32 %v663, 0.0
        %v792 = vmax.f32 %v664, 0.0
        %v793 = vmax.f32 %v665, 0.0
        %v794 = vmax.f32 %v666, 0.0
        %v795 = vmax.f32 %v667, 0.0
        %v796 = vmax.f32 %v668, 0.0
        %v797 = vmax.f32 %v669, 0.0
        %v798 = vmax.f32 %v670, 0.0
        %v799 = vmax.f32 %v671, 0.0
        %v800 = vmax.f32 %v672, 0.0
        %v801 = vmax.f32 %v673, 0.0
        %v802 = vmax.f32 %v674, 0.0
        %v803 = vmax.f32 %v675, 0.0
        %v804 = vmax.f32 %v676, 0.0
        %v805 = vmax.f32 %v677, 0.0
        %v806 = vmax.f32 %v678, 0.0
        %v807 = vmax.f32 %v679, 0.0
        %v808 = vmax.f32 %v680, 0.0
        %v809 = vmax.f32 %v681, 0.0
        %v810 = vmax.f32 %v682, 0.0
        %v811 = vmax.f32 %v683, 0.0
        %v812 = vmax.f32 %v684, 0.0
        %v813 = vmax.f32 %v685, 0.0
        %v814 = vmax.f32 %v686, 0.0
        %v815 = vmax.f32 %v687, 0.0
        %v816 = vmax.f32 %v688, 0.0
        %v817 = vmax.f32 %v689, 0.0
        %v818 = vmax.f32 %v690, 0.0
        %v819 = vmax.f32 %v691, 0.0
        %v820 = vmax.f32 %v692, 0.0
        %v821 = vmax.f32 %v693, 0.0
        %v822 = vmax.f32 %v694, 0.0
        %v823 = vmax.f32 %v695, 0.0
        %v824 = vmax.f32 %v696, 0.0
        %v825 = vmax.f32 %v697, 0.0
        %v826 = vmax.f32 %v698, 0.0
        %v827 = vmax.f32 %v699, 0.0
        %v828 = vmax.f32 %v700, 0.0
        %v829 = vmax.f32 %v701, 0.0
        %v830 = vmax.f32 %v702, 0.0
        %v831 = vmax.f32 %v703, 0.0
        %v832 = vmax.f32 %v704, 0.0
        %v833 = vmax.f32 %v705, 0.0
        %v834 = vmax.f32 %v706, 0.0
        %v835 = vmax.f32 %v707, 0.0
        %v836 = vmax.f32 %v708, 0.0
        %v837 = vmax.f32 %v709, 0.0
        %v838 = vmax.f32 %v710, 0.0
        %v839 = vmax.f32 %v711, 0.0
        %v840 = vmax.f32 %v712, 0.0
        %v841 = vmax.f32 %v713, 0.0
        %v842 = vmax.f32 %v714, 0.0
        %v843 = vmax.f32 %v715, 0.0
        %v844 = vmax.f32 %v716, 0.0
        %v845 = vmax.f32 %v717, 0.0
        %v846 = vmax.f32 %v718, 0.0
        %v847 = vmax.f32 %v719, 0.0
        %v848 = vmax.f32 %v720, 0.0
        %v849 = vmax.f32 %v721, 0.0
        %v850 = vmax.f32 %v722, 0.0
        %v851 = vmax.f32 %v723, 0.0
        %v852 = vmax.f32 %v724, 0.0
        %v853 = vmax.f32 %v725, 0.0
        %v854 = vmax.f32 %v726, 0.0
        %v855 = vmax.f32 %v727, 0.0
        %v856 = vmax.f32 %v728, 0.0
        %v857 = vmax.f32 %v729, 0.0
        %v858 = vmax.f32 %v730, 0.0
        %v859 = vmax.f32 %v731, 0.0
        %v860 = vmax.f32 %v732, 0.0
        %v861 = vmax.f32 %v733, 0.0
        %v862 = vmax.f32 %v734, 0.0
        %v863 = vmax.f32 %v735, 0.0
        %v864 = vmax.f32 %v736, 0.0
        %v865 = vmax.f32 %v737, 0.0
        %v866 = vmax.f32 %v738, 0.0
        %v867 = vmax.f32 %v739, 0.0
        %v868 = vmax.f32 %v740, 0.0
        %v869 = vmax.f32 %v741, 0.0
        %v870 = vmax.f32 %v742, 0.0
        %v871 = vmax.f32 %v743, 0.0
        %v872 = vmax.f32 %v744, 0.0
        %v873 = vmax.f32 %v745, 0.0
        %v874 = vmax.f32 %v746, 0.0
        %v875 = vmax.f32 %v747, 0.0
        %v876 = vmax.f32 %v748, 0.0
        %v877 = vmax.f32 %v749, 0.0
        %v878 = vmax.f32 %v750, 0.0
        %v879 = vmax.f32 %v751, 0.0
        %v880 = vmax.f32 %v752, 0.0
        %v881 = vmax.f32 %v753, 0.0
        %v882 = vmax.f32 %v754, 0.0
        %v883 = vmax.f32 %v755, 0.0
        %v884 = vmax.f32 %v756, 0.0
        %v885 = vmax.f32 %v757, 0.0
        %v886 = vmax.f32 %v758, 0.0
        %v887 = vmax.f32 %v759, 0.0
        %v888 = vmax.f32 %v760, 0.0
        %v889 = vmin.f32 %v761, 1.0
        %v890 = vmin.f32 %v762, 1.0
        %v891 = vmin.f32 %v763, 1.0
        %v892 = vmin.f32 %v764, 1.0
        %v893 = vmin.f32 %v765, 1.0
        %v894 = vmin.f32 %v766, 1.0
        %v895 = vmin.f32 %v767, 1.0
        %v896 = vmin.f32 %v768, 1.0
        %v897 = vmin.f32 %v769, 1.0
        %v898 = vmin.f32 %v770, 1.0
        %v899 = vmin.f32 %v771, 1.0
        %v900 = vmin.f32 %v772, 1.0
        %v901 = vmin.f32 %v773, 1.0
        %v902 = vmin.f32 %v774, 1.0
        %v903 = vmin.f32 %v775, 1.0
        %v904 = vmin.f32 %v776, 1.0
        %v905 = vmin.f32 %v777, 1.0
        %v906 = vmin.f32 %v778, 1.0
        %v907 = vmin.f32 %v779, 1.0
        %v908 = vmin.f32 %v780, 1.0
        %v909 = vmin.f32 %v781, 1.0
        %v910 = vmin.f32 %v782, 1.0
        %v911 = vmin.f32 %v783, 1.0
        %v912 = vmin.f32 %v784, 1.0
        %v913 = vmin.f32 %v785, 1.0
        %v914 = vmin.f32 %v786, 1.0
        %v915 = vmin.f32 %v787, 1.0
        %v916 = vmin.f32 %v788, 1.0
        %v917 = vmin.f32 %v789, 1.0
        %v918 = vmin.f32 %v790, 1.0
        %v919 = vmin.f32 %v791, 1.0
        %v920 = vmin.f32 %v792, 1.0
        %v921 = vmin.f32 %v793, 1.0
        %v922 = vmin.f32 %v794, 1.0
        %v923 = vmin.f32 %v795, 1.0
        %v924 = vmin.f32 %v796, 1.0
        %v925 = vmin.f32 %v797, 1.0
        %v926 = vmin.f32 %v798, 1.0
        %v927 = vmin.f32 %v799, 1.0
        %v928 = vmin.f32 %v800, 1.0
        %v929 = vmin.f32 %v801, 1.0
        %v930 = vmin.f32 %v802, 1.0
        %v931 = vmin.f32 %v803, 1.0
        %v932 = vmin.f32 %v804, 1.0
        %v933 = vmin.f32 %v805, 1.0
        %v934 = vmin.f32 %v806, 1.0
        %v935 = vmin.f32 %v807, 1.0
        %v936 = vmin.f32 %v808, 1.0
        %v937 = vmin.f32 %v809, 1.0
        %v938 = vmin.f32 %v810, 1.0
        %v939 = vmin.f32 %v811, 1.0
        %v940 = vmin.f32 %v812, 1.0
        %v941 = vmin.f32 %v813, 1.0
        %v942 = vmin.f32 %v814, 1.0
        %v943 = vmin.f32 %v815, 1.0
        %v944 = vmin.f32 %v816, 1.0
        %v945 = vmin.f32 %v817, 1.0
        %v946 = vmin.f32 %v818, 1.0
        %v947 = vmin.f32 %v819, 1.0
        %v948 = vmin.f32 %v820, 1.0
        %v949 = vmin.f32 %v821, 1.0
        %v950 = vmin.f32 %v822, 1.0
        %v951 = vmin.f32 %v823, 1.0
        %v952 = vmin.f32 %v824, 1.0
        %v953 = vmin.f32 %v825, 1.0
        %v954 = vmin.f32 %v826, 1.0
        %v955 = vmin.f32 %v827, 1.0
        %v956 = vmin.f32 %v828, 1.0
        %v957 = vmin.f32 %v829, 1.0
        %v958 = vmin.f32 %v830, 1.0
        %v959 = vmin.f32 %v831, 1.0
        %v960 = vmin.f32 %v832, 1.0
        %v961 = vmin.f32 %v833, 1.0
        %v962 = vmin.f32 %v834, 1.0
        %v963 = vmin.f32 %v835, 1.0
        %v964 = vmin.f32 %v836, 1.0
        %v965 = vmin.f32 %v837, 1.0
        %v966 = vmin.f32 %v838, 1.0
        %v967 = vmin.f32 %v839, 1.0
        %v968 = vmin.f32 %v840, 1.0
        %v969 = vmin.f32 %v841, 1.0
        %v970 = vmin.f32 %v842, 1.0
        %v971 = vmin.f32 %v843, 1.0
        %v972 = vmin.f32 %v844, 1.0
        %v973 = vmin.f32 %v845, 1.0
        %v974 = vmin.f32 %v846, 1.0
        %v975 = vmin.f32 %v847, 1.0
        %v976 = vmin.f32 %v848, 1.0
        %v977 = vmin.f32 %v849, 1.0
        %v978 = vmin.f32 %v850, 1.0
        %v979 = vmin.f32 %v851, 1.0
        %v980 = vmin.f32 %v852, 1.0
        %v981 = vmin.f32 %v853, 1.0
        %v982 = vmin.f32 %v854, 1.0
        %v983 = vmin.f32 %v855, 1.0
        %v984 = vmin.f32 %v856, 1.0
        %v985 = vmin.f32 %v857, 1.0
        %v986 = vmin.f32 %v858, 1.0
        %v987 = vmin.f32 %v859, 1.0
        %v988 = vmin.f32 %v860, 1.0
        %v989 = vmin.f32 %v861, 1.0
        %v990 = vmin.f32 %v862, 1.0
        %v991 = vmin.f32 %v863, 1.0
        %v992 = vmin.f32 %v864, 1.0
        %v993 = vmin.f32 %v865, 1.0
        %v994 = vmin.f32 %v866, 1.0
        %v995 = vmin.f32 %v867, 1.0
        %v996 = vmin.f32 %v868, 1.0
        %v997 = vmin.f32 %v869, 1.0
        %v998 = vmin.f32 %v870, 1.0
        %v999 = vmin.f32 %v871, 1.0
        %v1000 = vmin.f32 %v872, 1.0
        %v1001 = vmin.f32 %v873, 1.0
        %v1002 = vmin.f32 %v874, 1.0
        %v1003 = vmin.f32 %v875, 1.0
        %v1004 = vmin.f32 %v876, 1.0
        %v1005 = vmin.f32 %v877, 1.0
        %v1006 = vmin.f32 %v878, 1.0
        %v1007 = vmin.f32 %v879, 1.0
        %v1008 = vmin.f32 %v880, 1.0
        %v1009 = vmin.f32 %v881, 1.0
        %v1010 = vmin.f32 %v882, 1.0
        %v1011 = vmin.f32 %v883, 1.0
        %v1012 = vmin.f32 %v884, 1.0
        %v1013 = vmin.f32 %v885, 1.0
        %v1014 = vmin.f32 %v886, 1.0
        %v1015 = vmin.f32 %v887, 1.0
        %v1016 = vmin.f32 %v888, 1.0
        %v1017 = vld [vmem:[#allocation2] sm:$0xff]
        %v1018 = vld [vmem:[#allocation2 + $0x8] sm:$0xff]
        %v1019 = vld [vmem:[#allocation2 + $0x10] sm:$0xff]
        %v1020 = vld [vmem:[#allocation2 + $0x18] sm:$0xff]
        %v1021 = vld [vmem:[#allocation2 + $0x20] sm:$0xff]
        %v1022 = vld [vmem:[#allocation2 + $0x28] sm:$0xff]
        %v1023 = vld [vmem:[#allocation2 + $0x30] sm:$0xff]
        %v1024 = vld [vmem:[#allocation2 + $0x38] sm:$0xff]
        %v1025 = vmul.f32 %v505, %v889
        %v1026 = vmul.f32 %v506, %v890
        %v1027 = vmul.f32 %v507, %v891
        %v1028 = vmul.f32 %v508, %v892
        %v1029 = vmul.f32 %v509, %v893
        %v1030 = vmul.f32 %v510, %v894
        %v1031 = vmul.f32 %v511, %v895
        %v1032 = vmul.f32 %v512, %v896
        %v1033 = vmul.f32 %v513, %v897
        %v1034 = vmul.f32 %v514, %v898
        %v1035 = vmul.f32 %v515, %v899
        %v1036 = vmul.f32 %v516, %v900
        %v1037 = vmul.f32 %v517, %v901
        %v1038 = vmul.f32 %v518, %v902
        %v1039 = vmul.f32 %v519, %v903
        %v1040 = vmul.f32 %v520, %v904
        %v1041 = vmul.f32 %v521, %v905
        %v1042 = vmul.f32 %v522, %v906
        %v1043 = vmul.f32 %v523, %v907
        %v1044 = vmul.f32 %v524, %v908
        %v1045 = vmul.f32 %v525, %v909
        %v1046 = vmul.f32 %v526, %v910
        %v1047 = vmul.f32 %v527, %v911
        %v1048 = vmul.f32 %v528, %v912
        %v1049 = vmul.f32 %v529, %v913
        %v1050 = vmul.f32 %v530, %v914
        %v1051 = vmul.f32 %v531, %v915
        %v1052 = vmul.f32 %v532, %v916
        %v1053 = vmul.f32 %v533, %v917
        %v1054 = vmul.f32 %v534, %v918
        %v1055 = vmul.f32 %v535, %v919
        %v1056 = vmul.f32 %v536, %v920
        %v1057 = vmul.f32 %v537, %v921
        %v1058 = vmul.f32 %v538, %v922
        %v1059 = vmul.f32 %v539, %v923
        %v1060 = vmul.f32 %v540, %v924
        %v1061 = vmul.f32 %v541, %v925
        %v1062 = vmul.f32 %v542, %v926
        %v1063 = vmul.f32 %v543, %v927
        %v1064 = vmul.f32 %v544, %v928
        %v1065 = vmul.f32 %v545, %v929
        %v1066 = vmul.f32 %v546, %v930
        %v1067 = vmul.f32 %v547, %v931
        %v1068 = vmul.f32 %v548, %v932
        %v1069 = vmul.f32 %v549, %v933
        %v1070 = vmul.f32 %v550, %v934
        %v1071 = vmul.f32 %v551, %v935
        %v1072 = vmul.f32 %v552, %v936
        %v1073 = vmul.f32 %v553, %v937
        %v1074 = vmul.f32 %v554, %v938
        %v1075 = vmul.f32 %v555, %v939
        %v1076 = vmul.f32 %v556, %v940
        %v1077 = vmul.f32 %v557, %v941
        %v1078 = vmul.f32 %v558, %v942
        %v1079 = vmul.f32 %v559, %v943
        %v1080 = vmul.f32 %v560, %v944
        %v1081 = vmul.f32 %v561, %v945
        %v1082 = vmul.f32 %v562, %v946
        %v1083 = vmul.f32 %v563, %v947
        %v1084 = vmul.f32 %v564, %v948
        %v1085 = vmul.f32 %v565, %v949
        %v1086 = vmul.f32 %v566, %v950
        %v1087 = vmul.f32 %v567, %v951
        %v1088 = vmul.f32 %v568, %v952
        %v1089 = vmul.f32 %v569, %v953
        %v1090 = vmul.f32 %v570, %v954
        %v1091 = vmul.f32 %v571, %v955
        %v1092 = vmul.f32 %v572, %v956
        %v1093 = vmul.f32 %v573, %v957
        %v1094 = vmul.f32 %v574, %v958
        %v1095 = vmul.f32 %v575, %v959
        %v1096 = vmul.f32 %v576, %v960
        %v1097 = vmul.f32 %v577, %v961
        %v1098 = vmul.f32 %v578, %v962
        %v1099 = vmul.f32 %v579, %v963
        %v1100 = vmul.f32 %v580, %v964
        %v1101 = vmul.f32 %v581, %v965
        %v1102 = vmul.f32 %v582, %v966
        %v1103 = vmul.f32 %v583, %v967
        %v1104 = vmul.f32 %v584, %v968
        %v1105 = vmul.f32 %v585, %v969
        %v1106 = vmul.f32 %v586, %v970
        %v1107 = vmul.f32 %v587, %v971
        %v1108 = vmul.f32 %v588, %v972
        %v1109 = vmul.f32 %v589, %v973
        %v1110 = vmul.f32 %v590, %v974
        %v1111 = vmul.f32 %v591, %v975
        %v1112 = vmul.f32 %v592, %v976
        %v1113 = vmul.f32 %v593, %v977
        %v1114 = vmul.f32 %v594, %v978
        %v1115 = vmul.f32 %v595, %v979
        %v1116 = vmul.f32 %v596, %v980
        %v1117 = vmul.f32 %v597, %v981
        %v1118 = vmul.f32 %v598, %v982
        %v1119 = vmul.f32 %v599, %v983
        %v1120 = vmul.f32 %v600, %v984
        %v1121 = vmul.f32 %v601, %v985
        %v1122 = vmul.f32 %v602, %v986
        %v1123 = vmul.f32 %v603, %v987
        %v1124 = vmul.f32 %v604, %v988
        %v1125 = vmul.f32 %v605, %v989
        %v1126 = vmul.f32 %v606, %v990
        %v1127 = vmul.f32 %v607, %v991
        %v1128 = vmul.f32 %v608, %v992
        %v1129 = vmul.f32 %v609, %v993
        %v1130 = vmul.f32 %v610, %v994
        %v1131 = vmul.f32 %v611, %v995
        %v1132 = vmul.f32 %v612, %v996
        %v1133 = vmul.f32 %v613, %v997
        %v1134 = vmul.f32 %v614, %v998
        %v1135 = vmul.f32 %v615, %v999
        %v1136 = vmul.f32 %v616, %v1000
        %v1137 = vmul.f32 %v617, %v1001
        %v1138 = vmul.f32 %v618, %v1002
        %v1139 = vmul.f32 %v619, %v1003
        %v1140 = vmul.f32 %v620, %v1004
        %v1141 = vmul.f32 %v621, %v1005
        %v1142 = vmul.f32 %v622, %v1006
        %v1143 = vmul.f32 %v623, %v1007
        %v1144 = vmul.f32 %v624, %v1008
        %v1145 = vmul.f32 %v625, %v1009
        %v1146 = vmul.f32 %v626, %v1010
        %v1147 = vmul.f32 %v627, %v1011
        %v1148 = vmul.f32 %v628, %v1012
        %v1149 = vmul.f32 %v629, %v1013
        %v1150 = vmul.f32 %v630, %v1014
        %v1151 = vmul.f32 %v631, %v1015
        %v1152 = vmul.f32 %v632, %v1016
        %v1153 = vadd.f32 %v1025, %v1041
        %v1154 = vrot.slane %v1153, 4
        %v1155 = vadd.f32 %v1153, %v1154
        %v1156 = vrot.slane %v1155, 2
        %v1157 = vadd.f32 %v1155, %v1156
        %v1158 = vrot.slane %v1157, 1
        %v1159 = vadd.f32 %v1157, %v1158
        %v1160 = vadd.f32 %v1026, %v1042
        %v1161 = vrot.slane %v1160, 4
        %v1162 = vadd.f32 %v1160, %v1161
        %v1163 = vrot.slane %v1162, 2
        %v1164 = vadd.f32 %v1162, %v1163
        %v1165 = vrot.slane %v1164, 1
        %v1166 = vadd.f32 %v1164, %v1165
        %v1167 = vadd.f32 %v1027, %v1043
        %v1168 = vrot.slane %v1167, 4
        %v1169 = vadd.f32 %v1167, %v1168
        %v1170 = vrot.slane %v1169, 2
        %v1171 = vadd.f32 %v1169, %v1170
        %v1172 = vrot.slane %v1171, 1
        %v1173 = vadd.f32 %v1171, %v1172
        %v1174 = vadd.f32 %v1028, %v1044
        %v1175 = vrot.slane %v1174, 4
        %v1176 = vadd.f32 %v1174, %v1175
        %v1177 = vrot.slane %v1176, 2
        %v1178 = vadd.f32 %v1176, %v1177
        %v1179 = vrot.slane %v1178, 1
        %v1180 = vadd.f32 %v1178, %v1179
        %v1181 = vadd.f32 %v1029, %v1045
        %v1182 = vrot.slane %v1181, 4
        %v1183 = vadd.f32 %v1181, %v1182
        %v1184 = vrot.slane %v1183, 2
        %v1185 = vadd.f32 %v1183, %v1184
        %v1186 = vrot.slane %v1185, 1
        %v1187 = vadd.f32 %v1185, %v1186
        %v1188 = vadd.f32 %v1030, %v1046
        %v1189 = vrot.slane %v1188, 4
        %v1190 = vadd.f32 %v1188, %v1189
        %v1191 = vrot.slane %v1190, 2
        %v1192 = vadd.f32 %v1190, %v1191
        %v1193 = vrot.slane %v1192, 1
        %v1194 = vadd.f32 %v1192, %v1193
        %v1195 = vadd.f32 %v1031, %v1047
        %v1196 = vrot.slane %v1195, 4
        %v1197 = vadd.f32 %v1195, %v1196
        %v1198 = vrot.slane %v1197, 2
        %v1199 = vadd.f32 %v1197, %v1198
        %v1200 = vrot.slane %v1199, 1
        %v1201 = vadd.f32 %v1199, %v1200
        %v1202 = vadd.f32 %v1032, %v1048
        %v1203 = vrot.slane %v1202, 4
        %v1204 = vadd.f32 %v1202, %v1203
        %v1205 = vrot.slane %v1204, 2
        %v1206 = vadd.f32 %v1204, %v1205
        %v1207 = vrot.slane %v1206, 1
        %v1208 = vadd.f32 %v1206, %v1207
        %v1209 = vadd.f32 %v1033, %v1049
        %v1210 = vrot.slane %v1209, 4
        %v1211 = vadd.f32 %v1209, %v1210
        %v1212 = vrot.slane %v1211, 2
        %v1213 = vadd.f32 %v1211, %v1212
        %v1214 = vrot.slane %v1213, 1
        %v1215 = vadd.f32 %v1213, %v1214
        %v1216 = vadd.f32 %v1034, %v1050
        %v1217 = vrot.slane %v1216, 4
        %v1218 = vadd.f32 %v1216, %v1217
        %v1219 = vrot.slane %v1218, 2
        %v1220 = vadd.f32 %v1218, %v1219
        %v1221 = vrot.slane %v1220, 1
        %v1222 = vadd.f32 %v1220, %v1221
        %v1223 = vadd.f32 %v1035, %v1051
        %v1224 = vrot.slane %v1223, 4
        %v1225 = vadd.f32 %v1223, %v1224
        %v1226 = vrot.slane %v1225, 2
        %v1227 = vadd.f32 %v1225, %v1226
        %v1228 = vrot.slane %v1227, 1
        %v1229 = vadd.f32 %v1227, %v1228
        %v1230 = vadd.f32 %v1036, %v1052
        %v1231 = vrot.slane %v1230, 4
        %v1232 = vadd.f32 %v1230, %v1231
        %v1233 = vrot.slane %v1232, 2
        %v1234 = vadd.f32 %v1232, %v1233
        %v1235 = vrot.slane %v1234, 1
        %v1236 = vadd.f32 %v1234, %v1235
        %v1237 = vadd.f32 %v1037, %v1053
        %v1238 = vrot.slane %v1237, 4
        %v1239 = vadd.f32 %v1237, %v1238
        %v1240 = vrot.slane %v1239, 2
        %v1241 = vadd.f32 %v1239, %v1240
        %v1242 = vrot.slane %v1241, 1
        %v1243 = vadd.f32 %v1241, %v1242
        %v1244 = vadd.f32 %v1038, %v1054
        %v1245 = vrot.slane %v1244, 4
        %v1246 = vadd.f32 %v1244, %v1245
        %v1247 = vrot.slane %v1246, 2
        %v1248 = vadd.f32 %v1246, %v1247
        %v1249 = vrot.slane %v1248, 1
        %v1250 = vadd.f32 %v1248, %v1249
        %v1251 = vadd.f32 %v1039, %v1055
        %v1252 = vrot.slane %v1251, 4
        %v1253 = vadd.f32 %v1251, %v1252
        %v1254 = vrot.slane %v1253, 2
        %v1255 = vadd.f32 %v1253, %v1254
        %v1256 = vrot.slane %v1255, 1
        %v1257 = vadd.f32 %v1255, %v1256
        %v1258 = vadd.f32 %v1040, %v1056
        %v1259 = vrot.slane %v1258, 4
        %v1260 = vadd.f32 %v1258, %v1259
        %v1261 = vrot.slane %v1260, 2
        %v1262 = vadd.f32 %v1260, %v1261
        %v1263 = vrot.slane %v1262, 1
        %v1264 = vadd.f32 %v1262, %v1263
        %v1265 = vadd.f32 %v1057, %v1073
        %v1266 = vrot.slane %v1265, 4
        %v1267 = vadd.f32 %v1265, %v1266
        %v1268 = vrot.slane %v1267, 2
        %v1269 = vadd.f32 %v1267, %v1268
        %v1270 = vrot.slane %v1269, 1
        %v1271 = vadd.f32 %v1269, %v1270
        %v1272 = vadd.f32 %v1058, %v1074
        %v1273 = vrot.slane %v1272, 4
        %v1274 = vadd.f32 %v1272, %v1273
        %v1275 = vrot.slane %v1274, 2
        %v1276 = vadd.f32 %v1274, %v1275
        %v1277 = vrot.slane %v1276, 1
        %v1278 = vadd.f32 %v1276, %v1277
        %v1279 = vadd.f32 %v1059, %v1075
        %v1280 = vrot.slane %v1279, 4
        %v1281 = vadd.f32 %v1279, %v1280
        %v1282 = vrot.slane %v1281, 2
        %v1283 = vadd.f32 %v1281, %v1282
        %v1284 = vrot.slane %v1283, 1
        %v1285 = vadd.f32 %v1283, %v1284
        %v1286 = vadd.f32 %v1060, %v1076
        %v1287 = vrot.slane %v1286, 4
        %v1288 = vadd.f32 %v1286, %v1287
        %v1289 = vrot.slane %v1288, 2
        %v1290 = vadd.f32 %v1288, %v1289
        %v1291 = vrot.slane %v1290, 1
        %v1292 = vadd.f32 %v1290, %v1291
        %v1293 = vadd.f32 %v1061, %v1077
        %v1294 = vrot.slane %v1293, 4
        %v1295 = vadd.f32 %v1293, %v1294
        %v1296 = vrot.slane %v1295, 2
        %v1297 = vadd.f32 %v1295, %v1296
        %v1298 = vrot.slane %v1297, 1
        %v1299 = vadd.f32 %v1297, %v1298
        %v1300 = vadd.f32 %v1062, %v1078
        %v1301 = vrot.slane %v1300, 4
        %v1302 = vadd.f32 %v1300, %v1301
        %v1303 = vrot.slane %v1302, 2
        %v1304 = vadd.f32 %v1302, %v1303
        %v1305 = vrot.slane %v1304, 1
        %v1306 = vadd.f32 %v1304, %v1305
        %v1307 = vadd.f32 %v1063, %v1079
        %v1308 = vrot.slane %v1307, 4
        %v1309 = vadd.f32 %v1307, %v1308
        %v1310 = vrot.slane %v1309, 2
        %v1311 = vadd.f32 %v1309, %v1310
        %v1312 = vrot.slane %v1311, 1
        %v1313 = vadd.f32 %v1311, %v1312
        %v1314 = vadd.f32 %v1064, %v1080
        %v1315 = vrot.slane %v1314, 4
        %v1316 = vadd.f32 %v1314, %v1315
        %v1317 = vrot.slane %v1316, 2
        %v1318 = vadd.f32 %v1316, %v1317
        %v1319 = vrot.slane %v1318, 1
        %v1320 = vadd.f32 %v1318, %v1319
        %v1321 = vadd.f32 %v1065, %v1081
        %v1322 = vrot.slane %v1321, 4
        %v1323 = vadd.f32 %v1321, %v1322
        %v1324 = vrot.slane %v1323, 2
        %v1325 = vadd.f32 %v1323, %v1324
        %v1326 = vrot.slane %v1325, 1
        %v1327 = vadd.f32 %v1325, %v1326
        %v1328 = vadd.f32 %v1066, %v1082
        %v1329 = vrot.slane %v1328, 4
        %v1330 = vadd.f32 %v1328, %v1329
        %v1331 = vrot.slane %v1330, 2
        %v1332 = vadd.f32 %v1330, %v1331
        %v1333 = vrot.slane %v1332, 1
        %v1334 = vadd.f32 %v1332, %v1333
        %v1335 = vadd.f32 %v1067, %v1083
        %v1336 = vrot.slane %v1335, 4
        %v1337 = vadd.f32 %v1335, %v1336
        %v1338 = vrot.slane %v1337, 2
        %v1339 = vadd.f32 %v1337, %v1338
        %v1340 = vrot.slane %v1339, 1
        %v1341 = vadd.f32 %v1339, %v1340
        %v1342 = vadd.f32 %v1068, %v1084
        %v1343 = vrot.slane %v1342, 4
        %v1344 = vadd.f32 %v1342, %v1343
        %v1345 = vrot.slane %v1344, 2
        %v1346 = vadd.f32 %v1344, %v1345
        %v1347 = vrot.slane %v1346, 1
        %v1348 = vadd.f32 %v1346, %v1347
        %v1349 = vadd.f32 %v1069, %v1085
        %v1350 = vrot.slane %v1349, 4
        %v1351 = vadd.f32 %v1349, %v1350
        %v1352 = vrot.slane %v1351, 2
        %v1353 = vadd.f32 %v1351, %v1352
        %v1354 = vrot.slane %v1353, 1
        %v1355 = vadd.f32 %v1353, %v1354
        %v1356 = vadd.f32 %v1070, %v1086
        %v1357 = vrot.slane %v1356, 4
        %v1358 = vadd.f32 %v1356, %v1357
        %v1359 = vrot.slane %v1358, 2
        %v1360 = vadd.f32 %v1358, %v1359
        %v1361 = vrot.slane %v1360, 1
        %v1362 = vadd.f32 %v1360, %v1361
        %v1363 = vadd.f32 %v1071, %v1087
        %v1364 = vrot.slane %v1363, 4
        %v1365 = vadd.f32 %v1363, %v1364
        %v1366 = vrot.slane %v1365, 2
        %v1367 = vadd.f32 %v1365, %v1366
        %v1368 = vrot.slane %v1367, 1
        %v1369 = vadd.f32 %v1367, %v1368
        %v1370 = vadd.f32 %v1072, %v1088
        %v1371 = vrot.slane %v1370, 4
        %v1372 = vadd.f32 %v1370, %v1371
        %v1373 = vrot.slane %v1372, 2
        %v1374 = vadd.f32 %v1372, %v1373
        %v1375 = vrot.slane %v1374, 1
        %v1376 = vadd.f32 %v1374, %v1375
        %v1377 = vadd.f32 %v1089, %v1105
        %v1378 = vrot.slane %v1377, 4
        %v1379 = vadd.f32 %v1377, %v1378
        %v1380 = vrot.slane %v1379, 2
        %v1381 = vadd.f32 %v1379, %v1380
        %v1382 = vrot.slane %v1381, 1
        %v1383 = vadd.f32 %v1381, %v1382
        %v1384 = vadd.f32 %v1090, %v1106
        %v1385 = vrot.slane %v1384, 4
        %v1386 = vadd.f32 %v1384, %v1385
        %v1387 = vrot.slane %v1386, 2
        %v1388 = vadd.f32 %v1386, %v1387
        %v1389 = vrot.slane %v1388, 1
        %v1390 = vadd.f32 %v1388, %v1389
        %v1391 = vadd.f32 %v1091, %v1107
        %v1392 = vrot.slane %v1391, 4
        %v1393 = vadd.f32 %v1391, %v1392
        %v1394 = vrot.slane %v1393, 2
        %v1395 = vadd.f32 %v1393, %v1394
        %v1396 = vrot.slane %v1395, 1
        %v1397 = vadd.f32 %v1395, %v1396
        %v1398 = vadd.f32 %v1092, %v1108
        %v1399 = vrot.slane %v1398, 4
        %v1400 = vadd.f32 %v1398, %v1399
        %v1401 = vrot.slane %v1400, 2
        %v1402 = vadd.f32 %v1400, %v1401
        %v1403 = vrot.slane %v1402, 1
        %v1404 = vadd.f32 %v1402, %v1403
        %v1405 = vadd.f32 %v1093, %v1109
        %v1406 = vrot.slane %v1405, 4
        %v1407 = vadd.f32 %v1405, %v1406
        %v1408 = vrot.slane %v1407, 2
        %v1409 = vadd.f32 %v1407, %v1408
        %v1410 = vrot.slane %v1409, 1
        %v1411 = vadd.f32 %v1409, %v1410
        %v1412 = vadd.f32 %v1094, %v1110
        %v1413 = vrot.slane %v1412, 4
        %v1414 = vadd.f32 %v1412, %v1413
        %v1415 = vrot.slane %v1414, 2
        %v1416 = vadd.f32 %v1414, %v1415
        %v1417 = vrot.slane %v1416, 1
        %v1418 = vadd.f32 %v1416, %v1417
        %v1419 = vadd.f32 %v1095, %v1111
        %v1420 = vrot.slane %v1419, 4
        %v1421 = vadd.f32 %v1419, %v1420
        %v1422 = vrot.slane %v1421, 2
        %v1423 = vadd.f32 %v1421, %v1422
        %v1424 = vrot.slane %v1423, 1
        %v1425 = vadd.f32 %v1423, %v1424
        %v1426 = vadd.f32 %v1096, %v1112
        %v1427 = vrot.slane %v1426, 4
        %v1428 = vadd.f32 %v1426, %v1427
        %v1429 = vrot.slane %v1428, 2
        %v1430 = vadd.f32 %v1428, %v1429
        %v1431 = vrot.slane %v1430, 1
        %v1432 = vadd.f32 %v1430, %v1431
        %v1433 = vadd.f32 %v1097, %v1113
        %v1434 = vrot.slane %v1433, 4
        %v1435 = vadd.f32 %v1433, %v1434
        %v1436 = vrot.slane %v1435, 2
        %v1437 = vadd.f32 %v1435, %v1436
        %v1438 = vrot.slane %v1437, 1
        %v1439 = vadd.f32 %v1437, %v1438
        %v1440 = vadd.f32 %v1098, %v1114
        %v1441 = vrot.slane %v1440, 4
        %v1442 = vadd.f32 %v1440, %v1441
        %v1443 = vrot.slane %v1442, 2
        %v1444 = vadd.f32 %v1442, %v1443
        %v1445 = vrot.slane %v1444, 1
        %v1446 = vadd.f32 %v1444, %v1445
        %v1447 = vadd.f32 %v1099, %v1115
        %v1448 = vrot.slane %v1447, 4
        %v1449 = vadd.f32 %v1447, %v1448
        %v1450 = vrot.slane %v1449, 2
        %v1451 = vadd.f32 %v1449, %v1450
        %v1452 = vrot.slane %v1451, 1
        %v1453 = vadd.f32 %v1451, %v1452
        %v1454 = vadd.f32 %v1100, %v1116
        %v1455 = vrot.slane %v1454, 4
        %v1456 = vadd.f32 %v1454, %v1455
        %v1457 = vrot.slane %v1456, 2
        %v1458 = vadd.f32 %v1456, %v1457
        %v1459 = vrot.slane %v1458, 1
        %v1460 = vadd.f32 %v1458, %v1459
        %v1461 = vadd.f32 %v1101, %v1117
        %v1462 = vrot.slane %v1461, 4
        %v1463 = vadd.f32 %v1461, %v1462
        %v1464 = vrot.slane %v1463, 2
        %v1465 = vadd.f32 %v1463, %v1464
        %v1466 = vrot.slane %v1465, 1
        %v1467 = vadd.f32 %v1465, %v1466
        %v1468 = vadd.f32 %v1102, %v1118
        %v1469 = vrot.slane %v1468, 4
        %v1470 = vadd.f32 %v1468, %v1469
        %v1471 = vrot.slane %v1470, 2
        %v1472 = vadd.f32 %v1470, %v1471
        %v1473 = vrot.slane %v1472, 1
        %v1474 = vadd.f32 %v1472, %v1473
        %v1475 = vadd.f32 %v1103, %v1119
        %v1476 = vrot.slane %v1475, 4
        %v1477 = vadd.f32 %v1475, %v1476
        %v1478 = vrot.slane %v1477, 2
        %v1479 = vadd.f32 %v1477, %v1478
        %v1480 = vrot.slane %v1479, 1
        %v1481 = vadd.f32 %v1479, %v1480
        %v1482 = vadd.f32 %v1104, %v1120
        %v1483 = vrot.slane %v1482, 4
        %v1484 = vadd.f32 %v1482, %v1483
        %v1485 = vrot.slane %v1484, 2
        %v1486 = vadd.f32 %v1484, %v1485
        %v1487 = vrot.slane %v1486, 1
        %v1488 = vadd.f32 %v1486, %v1487
        %v1489 = vadd.f32 %v1121, %v1137
        %v1490 = vrot.slane %v1489, 4
        %v1491 = vadd.f32 %v1489, %v1490
        %v1492 = vrot.slane %v1491, 2
        %v1493 = vadd.f32 %v1491, %v1492
        %v1494 = vrot.slane %v1493, 1
        %v1495 = vadd.f32 %v1493, %v1494
        %v1496 = vadd.f32 %v1122, %v1138
        %v1497 = vrot.slane %v1496, 4
        %v1498 = vadd.f32 %v1496, %v1497
        %v1499 = vrot.slane %v1498, 2
        %v1500 = vadd.f32 %v1498, %v1499
        %v1501 = vrot.slane %v1500, 1
        %v1502 = vadd.f32 %v1500, %v1501
        %v1503 = vadd.f32 %v1123, %v1139
        %v1504 = vrot.slane %v1503, 4
        %v1505 = vadd.f32 %v1503, %v1504
        %v1506 = vrot.slane %v1505, 2
        %v1507 = vadd.f32 %v1505, %v1506
        %v1508 = vrot.slane %v1507, 1
        %v1509 = vadd.f32 %v1507, %v1508
        %v1510 = vadd.f32 %v1124, %v1140
        %v1511 = vrot.slane %v1510, 4
        %v1512 = vadd.f32 %v1510, %v1511
        %v1513 = vrot.slane %v1512, 2
        %v1514 = vadd.f32 %v1512, %v1513
        %v1515 = vrot.slane %v1514, 1
        %v1516 = vadd.f32 %v1514, %v1515
        %v1517 = vadd.f32 %v1125, %v1141
        %v1518 = vrot.slane %v1517, 4
        %v1519 = vadd.f32 %v1517, %v1518
        %v1520 = vrot.slane %v1519, 2
        %v1521 = vadd.f32 %v1519, %v1520
        %v1522 = vrot.slane %v1521, 1
        %v1523 = vadd.f32 %v1521, %v1522
        %v1524 = vadd.f32 %v1126, %v1142
        %v1525 = vrot.slane %v1524, 4
        %v1526 = vadd.f32 %v1524, %v1525
        %v1527 = vrot.slane %v1526, 2
        %v1528 = vadd.f32 %v1526, %v1527
        %v1529 = vrot.slane %v1528, 1
        %v1530 = vadd.f32 %v1528, %v1529
        %v1531 = vadd.f32 %v1127, %v1143
        %v1532 = vrot.slane %v1531, 4
        %v1533 = vadd.f32 %v1531, %v1532
        %v1534 = vrot.slane %v1533, 2
        %v1535 = vadd.f32 %v1533, %v1534
        %v1536 = vrot.slane %v1535, 1
        %v1537 = vadd.f32 %v1535, %v1536
        %v1538 = vadd.f32 %v1128, %v1144
        %v1539 = vrot.slane %v1538, 4
        %v1540 = vadd.f32 %v1538, %v1539
        %v1541 = vrot.slane %v1540, 2
        %v1542 = vadd.f32 %v1540, %v1541
        %v1543 = vrot.slane %v1542, 1
        %v1544 = vadd.f32 %v1542, %v1543
        %v1545 = vadd.f32 %v1129, %v1145
        %v1546 = vrot.slane %v1545, 4
        %v1547 = vadd.f32 %v1545, %v1546
        %v1548 = vrot.slane %v1547, 2
        %v1549 = vadd.f32 %v1547, %v1548
        %v1550 = vrot.slane %v1549, 1
        %v1551 = vadd.f32 %v1549, %v1550
        %v1552 = vadd.f32 %v1130, %v1146
        %v1553 = vrot.slane %v1552, 4
        %v1554 = vadd.f32 %v1552, %v1553
        %v1555 = vrot.slane %v1554, 2
        %v1556 = vadd.f32 %v1554, %v1555
        %v1557 = vrot.slane %v1556, 1
        %v1558 = vadd.f32 %v1556, %v1557
        %v1559 = vadd.f32 %v1131, %v1147
        %v1560 = vrot.slane %v1559, 4
        %v1561 = vadd.f32 %v1559, %v1560
        %v1562 = vrot.slane %v1561, 2
        %v1563 = vadd.f32 %v1561, %v1562
        %v1564 = vrot.slane %v1563, 1
        %v1565 = vadd.f32 %v1563, %v1564
        %v1566 = vadd.f32 %v1132, %v1148
        %v1567 = vrot.slane %v1566, 4
        %v1568 = vadd.f32 %v1566, %v1567
        %v1569 = vrot.slane %v1568, 2
        %v1570 = vadd.f32 %v1568, %v1569
        %v1571 = vrot.slane %v1570, 1
        %v1572 = vadd.f32 %v1570, %v1571
        %v1573 = vadd.f32 %v1133, %v1149
        %v1574 = vrot.slane %v1573, 4
        %v1575 = vadd.f32 %v1573, %v1574
        %v1576 = vrot.slane %v1575, 2
        %v1577 = vadd.f32 %v1575, %v1576
        %v1578 = vrot.slane %v1577, 1
        %v1579 = vadd.f32 %v1577, %v1578
        %v1580 = vadd.f32 %v1134, %v1150
        %v1581 = vrot.slane %v1580, 4
        %v1582 = vadd.f32 %v1580, %v1581
        %v1583 = vrot.slane %v1582, 2
        %v1584 = vadd.f32 %v1582, %v1583
        %v1585 = vrot.slane %v1584, 1
        %v1586 = vadd.f32 %v1584, %v1585
        %v1587 = vadd.f32 %v1135, %v1151
        %v1588 = vrot.slane %v1587, 4
        %v1589 = vadd.f32 %v1587, %v1588
        %v1590 = vrot.slane %v1589, 2
        %v1591 = vadd.f32 %v1589, %v1590
        %v1592 = vrot.slane %v1591, 1
        %v1593 = vadd.f32 %v1591, %v1592
        %v1594 = vadd.f32 %v1136, %v1152
        %v1595 = vrot.slane %v1594, 4
        %v1596 = vadd.f32 %v1594, %v1595
        %v1597 = vrot.slane %v1596, 2
        %v1598 = vadd.f32 %v1596, %v1597
        %v1599 = vrot.slane %v1598, 1
        %v1600 = vadd.f32 %v1598, %v1599
        %v1665 = vcombine.low %v1159, %v1166
        %v1666 = vcombine.low %v1173, %v1180
        %v1667 = vcombine.low %v1187, %v1194
        %v1668 = vcombine.low %v1201, %v1208
        %v1669 = vcombine.low %v1215, %v1222
        %v1670 = vcombine.low %v1229, %v1236
        %v1671 = vcombine.low %v1243, %v1250
        %v1672 = vcombine.low %v1257, %v1264
        %v1673 = vcombine.low %v1271, %v1278
        %v1674 = vcombine.low %v1285, %v1292
        %v1675 = vcombine.low %v1299, %v1306
        %v1676 = vcombine.low %v1313, %v1320
        %v1677 = vcombine.low %v1327, %v1334
        %v1678 = vcombine.low %v1341, %v1348
        %v1679 = vcombine.low %v1355, %v1362
        %v1680 = vcombine.low %v1369, %v1376
        %v1681 = vcombine.low %v1383, %v1390
        %v1682 = vcombine.low %v1397, %v1404
        %v1683 = vcombine.low %v1411, %v1418
        %v1684 = vcombine.low %v1425, %v1432
        %v1685 = vcombine.low %v1439, %v1446
        %v1686 = vcombine.low %v1453, %v1460
        %v1687 = vcombine.low %v1467, %v1474
        %v1688 = vcombine.low %v1481, %v1488
        %v1689 = vcombine.low %v1495, %v1502
        %v1690 = vcombine.low %v1509, %v1516
        %v1691 = vcombine.low %v1523, %v1530
        %v1692 = vcombine.low %v1537, %v1544
        %v1693 = vcombine.low %v1551, %v1558
        %v1694 = vcombine.low %v1565, %v1572
        %v1695 = vcombine.low %v1579, %v1586
        %v1696 = vcombine.low %v1593, %v1600
        %v1697 = vrot.slane %v1673, 7
        %vm1698 = vcmask 1041409
        %v1699 = vsel %vm1698, %v1697, %v1665
        %vm1700 = vcmask 1045509
        %v1701 = vsel %vm1700, %v1697, %v1699
        %v1702 = vrot.slane %v1681, 6
        %vm1703 = vcmask 1042434
        %v1704 = vsel %vm1703, %v1702, %v1701
        %vm1705 = vcmask 1046534
        %v1706 = vsel %vm1705, %v1702, %v1704
        %v1707 = vrot.slane %v1689, 5
        %vm1708 = vcmask 1043459
        %v1709 = vsel %vm1708, %v1707, %v1706
        %vm1710 = vcmask 1047559
        %v1711 = vsel %vm1710, %v1707, %v1709
        %v1712 = vrot.slane %v1674, 7
        %v1713 = vsel %vm1698, %v1712, %v1666
        %v1714 = vsel %vm1700, %v1712, %v1713
        %v1715 = vrot.slane %v1682, 6
        %v1716 = vsel %vm1703, %v1715, %v1714
        %v1717 = vsel %vm1705, %v1715, %v1716
        %v1718 = vrot.slane %v1690, 5
        %v1719 = vsel %vm1708, %v1718, %v1717
        %v1720 = vsel %vm1710, %v1718, %v1719
        %v1721 = vrot.slane %v1675, 7
        %v1722 = vsel %vm1698, %v1721, %v1667
        %v1723 = vsel %vm1700, %v1721, %v1722
        %v1724 = vrot.slane %v1683, 6
        %v1725 = vsel %vm1703, %v1724, %v1723
        %v1726 = vsel %vm1705, %v1724, %v1725
        %v1727 = vrot.slane %v1691, 5
        %v1728 = vsel %vm1708, %v1727, %v1726
        %v1729 = vsel %vm1710, %v1727, %v1728
        %v1730 = vrot.slane %v1676, 7
        %v1731 = vsel %vm1698, %v1730, %v1668
        %v1732 = vsel %vm1700, %v1730, %v1731
        %v1733 = vrot.slane %v1684, 6
        %v1734 = vsel %vm1703, %v1733, %v1732
        %v1735 = vsel %vm1705, %v1733, %v1734
        %v1736 = vrot.slane %v1692, 5
        %v1737 = vsel %vm1708, %v1736, %v1735
        %v1738 = vsel %vm1710, %v1736, %v1737
        %v1739 = vrot.slane %v1677, 7
        %v1740 = vsel %vm1698, %v1739, %v1669
        %v1741 = vsel %vm1700, %v1739, %v1740
        %v1742 = vrot.slane %v1685, 6
        %v1743 = vsel %vm1703, %v1742, %v1741
        %v1744 = vsel %vm1705, %v1742, %v1743
        %v1745 = vrot.slane %v1693, 5
        %v1746 = vsel %vm1708, %v1745, %v1744
        %v1747 = vsel %vm1710, %v1745, %v1746
        %v1748 = vrot.slane %v1678, 7
        %v1749 = vsel %vm1698, %v1748, %v1670
        %v1750 = vsel %vm1700, %v1748, %v1749
        %v1751 = vrot.slane %v1686, 6
        %v1752 = vsel %vm1703, %v1751, %v1750
        %v1753 = vsel %vm1705, %v1751, %v1752
        %v1754 = vrot.slane %v1694, 5
        %v1755 = vsel %vm1708, %v1754, %v1753
        %v1756 = vsel %vm1710, %v1754, %v1755
        %v1757 = vrot.slane %v1679, 7
        %v1758 = vsel %vm1698, %v1757, %v1671
        %v1759 = vsel %vm1700, %v1757, %v1758
        %v1760 = vrot.slane %v1687, 6
        %v1761 = vsel %vm1703, %v1760, %v1759
        %v1762 = vsel %vm1705, %v1760, %v1761
        %v1763 = vrot.slane %v1695, 5
        %v1764 = vsel %vm1708, %v1763, %v1762
        %v1765 = vsel %vm1710, %v1763, %v1764
        %v1766 = vrot.slane %v1680, 7
        %v1767 = vsel %vm1698, %v1766, %v1672
        %v1768 = vsel %vm1700, %v1766, %v1767
        %v1769 = vrot.slane %v1688, 6
        %v1770 = vsel %vm1703, %v1769, %v1768
        %v1771 = vsel %vm1705, %v1769, %v1770
        %v1772 = vrot.slane %v1696, 5
        %v1773 = vsel %vm1708, %v1772, %v1771
        %v1774 = vsel %vm1710, %v1772, %v1773
        %v1783 = vadd.f32 %v1017, %v1711
        %v1784 = vadd.f32 %v1018, %v1720
        %v1785 = vadd.f32 %v1019, %v1729
        %v1786 = vadd.f32 %v1020, %v1738
        %v1787 = vadd.f32 %v1021, %v1747
        %v1788 = vadd.f32 %v1022, %v1756
        %v1789 = vadd.f32 %v1023, %v1765
        %v1790 = vadd.f32 %v1024, %v1774
        %1791 = vst [vmem:[#allocation2] sm:$0xff] %v1783
        %1792 = vst [vmem:[#allocation2 + $0x8] sm:$0xff] %v1784
        %1793 = vst [vmem:[#allocation2 + $0x10] sm:$0xff] %v1785
        %1794 = vst [vmem:[#allocation2 + $0x18] sm:$0xff] %v1786
        %1795 = vst [vmem:[#allocation2 + $0x20] sm:$0xff] %v1787
        %1796 = vst [vmem:[#allocation2 + $0x28] sm:$0xff] %v1788
        %1797 = vst [vmem:[#allocation2 + $0x30] sm:$0xff] %v1789
        %1798 = vst [vmem:[#allocation2 + $0x38] sm:$0xff] %v1790
        %v1799 = vld [vmem:[#allocation3] sm:$0xff]
        %v1800 = vld [vmem:[#allocation3 + $0x8] sm:$0xff]
        %v1801 = vld [vmem:[#allocation3 + $0x10] sm:$0xff]
        %v1802 = vld [vmem:[#allocation3 + $0x18] sm:$0xff]
        %v1803 = vld [vmem:[#allocation3 + $0x20] sm:$0xff]
        %v1804 = vld [vmem:[#allocation3 + $0x28] sm:$0xff]
        %v1805 = vld [vmem:[#allocation3 + $0x30] sm:$0xff]
        %v1806 = vld [vmem:[#allocation3 + $0x38] sm:$0xff]
        %v1807 = vadd.f32 %v505, %v521
        %v1808 = vrot.slane %v1807, 4
        %v1809 = vadd.f32 %v1807, %v1808
        %v1810 = vrot.slane %v1809, 2
        %v1811 = vadd.f32 %v1809, %v1810
        %v1812 = vrot.slane %v1811, 1
        %v1813 = vadd.f32 %v1811, %v1812
        %v1814 = vadd.f32 %v506, %v522
        %v1815 = vrot.slane %v1814, 4
        %v1816 = vadd.f32 %v1814, %v1815
        %v1817 = vrot.slane %v1816, 2
        %v1818 = vadd.f32 %v1816, %v1817
        %v1819 = vrot.slane %v1818, 1
        %v1820 = vadd.f32 %v1818, %v1819
        %v1821 = vadd.f32 %v507, %v523
        %v1822 = vrot.slane %v1821, 4
        %v1823 = vadd.f32 %v1821, %v1822
        %v1824 = vrot.slane %v1823, 2
        %v1825 = vadd.f32 %v1823, %v1824
        %v1826 = vrot.slane %v1825, 1
        %v1827 = vadd.f32 %v1825, %v1826
        %v1828 = vadd.f32 %v508, %v524
        %v1829 = vrot.slane %v1828, 4
        %v1830 = vadd.f32 %v1828, %v1829
        %v1831 = vrot.slane %v1830, 2
        %v1832 = vadd.f32 %v1830, %v1831
        %v1833 = vrot.slane %v1832, 1
        %v1834 = vadd.f32 %v1832, %v1833
        %v1835 = vadd.f32 %v509, %v525
        %v1836 = vrot.slane %v1835, 4
        %v1837 = vadd.f32 %v1835, %v1836
        %v1838 = vrot.slane %v1837, 2
        %v1839 = vadd.f32 %v1837, %v1838
        %v1840 = vrot.slane %v1839, 1
        %v1841 = vadd.f32 %v1839, %v1840
        %v1842 = vadd.f32 %v510, %v526
        %v1843 = vrot.slane %v1842, 4
        %v1844 = vadd.f32 %v1842, %v1843
        %v1845 = vrot.slane %v1844, 2
        %v1846 = vadd.f32 %v1844, %v1845
        %v1847 = vrot.slane %v1846, 1
        %v1848 = vadd.f32 %v1846, %v1847
        %v1849 = vadd.f32 %v511, %v527
        %v1850 = vrot.slane %v1849, 4
        %v1851 = vadd.f32 %v1849, %v1850
        %v1852 = vrot.slane %v1851, 2
        %v1853 = vadd.f32 %v1851, %v1852
        %v1854 = vrot.slane %v1853, 1
        %v1855 = vadd.f32 %v1853, %v1854
        %v1856 = vadd.f32 %v512, %v528
        %v1857 = vrot.slane %v1856, 4
        %v1858 = vadd.f32 %v1856, %v1857
        %v1859 = vrot.slane %v1858, 2
        %v1860 = vadd.f32 %v1858, %v1859
        %v1861 = vrot.slane %v1860, 1
        %v1862 = vadd.f32 %v1860, %v1861
        %v1863 = vadd.f32 %v513, %v529
        %v1864 = vrot.slane %v1863, 4
        %v1865 = vadd.f32 %v1863, %v1864
        %v1866 = vrot.slane %v1865, 2
        %v1867 = vadd.f32 %v1865, %v1866
        %v1868 = vrot.slane %v1867, 1
        %v1869 = vadd.f32 %v1867, %v1868
        %v1870 = vadd.f32 %v514, %v530
        %v1871 = vrot.slane %v1870, 4
        %v1872 = vadd.f32 %v1870, %v1871
        %v1873 = vrot.slane %v1872, 2
        %v1874 = vadd.f32 %v1872, %v1873
        %v1875 = vrot.slane %v1874, 1
        %v1876 = vadd.f32 %v1874, %v1875
        %v1877 = vadd.f32 %v515, %v531
        %v1878 = vrot.slane %v1877, 4
        %v1879 = vadd.f32 %v1877, %v1878
        %v1880 = vrot.slane %v1879, 2
        %v1881 = vadd.f32 %v1879, %v1880
        %v1882 = vrot.slane %v1881, 1
        %v1883 = vadd.f32 %v1881, %v1882
        %v1884 = vadd.f32 %v516, %v532
        %v1885 = vrot.slane %v1884, 4
        %v1886 = vadd.f32 %v1884, %v1885
        %v1887 = vrot.slane %v1886, 2
        %v1888 = vadd.f32 %v1886, %v1887
        %v1889 = vrot.slane %v1888, 1
        %v1890 = vadd.f32 %v1888, %v1889
        %v1891 = vadd.f32 %v517, %v533
        %v1892 = vrot.slane %v1891, 4
        %v1893 = vadd.f32 %v1891, %v1892
        %v1894 = vrot.slane %v1893, 2
        %v1895 = vadd.f32 %v1893, %v1894
        %v1896 = vrot.slane %v1895, 1
        %v1897 = vadd.f32 %v1895, %v1896
        %v1898 = vadd.f32 %v518, %v534
        %v1899 = vrot.slane %v1898, 4
        %v1900 = vadd.f32 %v1898, %v1899
        %v1901 = vrot.slane %v1900, 2
        %v1902 = vadd.f32 %v1900, %v1901
        %v1903 = vrot.slane %v1902, 1
        %v1904 = vadd.f32 %v1902, %v1903
        %v1905 = vadd.f32 %v519, %v535
        %v1906 = vrot.slane %v1905, 4
        %v1907 = vadd.f32 %v1905, %v1906
        %v1908 = vrot.slane %v1907, 2
        %v1909 = vadd.f32 %v1907, %v1908
        %v1910 = vrot.slane %v1909, 1
        %v1911 = vadd.f32 %v1909, %v1910
        %v1912 = vadd.f32 %v520, %v536
        %v1913 = vrot.slane %v1912, 4
        %v1914 = vadd.f32 %v1912, %v1913
        %v1915 = vrot.slane %v1914, 2
        %v1916 = vadd.f32 %v1914, %v1915
        %v1917 = vrot.slane %v1916, 1
        %v1918 = vadd.f32 %v1916, %v1917
        %v1919 = vadd.f32 %v537, %v553
        %v1920 = vrot.slane %v1919, 4
        %v1921 = vadd.f32 %v1919, %v1920
        %v1922 = vrot.slane %v1921, 2
        %v1923 = vadd.f32 %v1921, %v1922
        %v1924 = vrot.slane %v1923, 1
        %v1925 = vadd.f32 %v1923, %v1924
        %v1926 = vadd.f32 %v538, %v554
        %v1927 = vrot.slane %v1926, 4
        %v1928 = vadd.f32 %v1926, %v1927
        %v1929 = vrot.slane %v1928, 2
        %v1930 = vadd.f32 %v1928, %v1929
        %v1931 = vrot.slane %v1930, 1
        %v1932 = vadd.f32 %v1930, %v1931
        %v1933 = vadd.f32 %v539, %v555
        %v1934 = vrot.slane %v1933, 4
        %v1935 = vadd.f32 %v1933, %v1934
        %v1936 = vrot.slane %v1935, 2
        %v1937 = vadd.f32 %v1935, %v1936
        %v1938 = vrot.slane %v1937, 1
        %v1939 = vadd.f32 %v1937, %v1938
        %v1940 = vadd.f32 %v540, %v556
        %v1941 = vrot.slane %v1940, 4
        %v1942 = vadd.f32 %v1940, %v1941
        %v1943 = vrot.slane %v1942, 2
        %v1944 = vadd.f32 %v1942, %v1943
        %v1945 = vrot.slane %v1944, 1
        %v1946 = vadd.f32 %v1944, %v1945
        %v1947 = vadd.f32 %v541, %v557
        %v1948 = vrot.slane %v1947, 4
        %v1949 = vadd.f32 %v1947, %v1948
        %v1950 = vrot.slane %v1949, 2
        %v1951 = vadd.f32 %v1949, %v1950
        %v1952 = vrot.slane %v1951, 1
        %v1953 = vadd.f32 %v1951, %v1952
        %v1954 = vadd.f32 %v542, %v558
        %v1955 = vrot.slane %v1954, 4
        %v1956 = vadd.f32 %v1954, %v1955
        %v1957 = vrot.slane %v1956, 2
        %v1958 = vadd.f32 %v1956, %v1957
        %v1959 = vrot.slane %v1958, 1
        %v1960 = vadd.f32 %v1958, %v1959
        %v1961 = vadd.f32 %v543, %v559
        %v1962 = vrot.slane %v1961, 4
        %v1963 = vadd.f32 %v1961, %v1962
        %v1964 = vrot.slane %v1963, 2
        %v1965 = vadd.f32 %v1963, %v1964
        %v1966 = vrot.slane %v1965, 1
        %v1967 = vadd.f32 %v1965, %v1966
        %v1968 = vadd.f32 %v544, %v560
        %v1969 = vrot.slane %v1968, 4
        %v1970 = vadd.f32 %v1968, %v1969
        %v1971 = vrot.slane %v1970, 2
        %v1972 = vadd.f32 %v1970, %v1971
        %v1973 = vrot.slane %v1972, 1
        %v1974 = vadd.f32 %v1972, %v1973
        %v1975 = vadd.f32 %v545, %v561
        %v1976 = vrot.slane %v1975, 4
        %v1977 = vadd.f32 %v1975, %v1976
        %v1978 = vrot.slane %v1977, 2
        %v1979 = vadd.f32 %v1977, %v1978
        %v1980 = vrot.slane %v1979, 1
        %v1981 = vadd.f32 %v1979, %v1980
        %v1982 = vadd.f32 %v546, %v562
        %v1983 = vrot.slane %v1982, 4
        %v1984 = vadd.f32 %v1982, %v1983
        %v1985 = vrot.slane %v1984, 2
        %v1986 = vadd.f32 %v1984, %v1985
        %v1987 = vrot.slane %v1986, 1
        %v1988 = vadd.f32 %v1986, %v1987
        %v1989 = vadd.f32 %v547, %v563
        %v1990 = vrot.slane %v1989, 4
        %v1991 = vadd.f32 %v1989, %v1990
        %v1992 = vrot.slane %v1991, 2
        %v1993 = vadd.f32 %v1991, %v1992
        %v1994 = vrot.slane %v1993, 1
        %v1995 = vadd.f32 %v1993, %v1994
        %v1996 = vadd.f32 %v548, %v564
        %v1997 = vrot.slane %v1996, 4
        %v1998 = vadd.f32 %v1996, %v1997
        %v1999 = vrot.slane %v1998, 2
        %v2000 = vadd.f32 %v1998, %v1999
        %v2001 = vrot.slane %v2000, 1
        %v2002 = vadd.f32 %v2000, %v2001
        %v2003 = vadd.f32 %v549, %v565
        %v2004 = vrot.slane %v2003, 4
        %v2005 = vadd.f32 %v2003, %v2004
        %v2006 = vrot.slane %v2005, 2
        %v2007 = vadd.f32 %v2005, %v2006
        %v2008 = vrot.slane %v2007, 1
        %v2009 = vadd.f32 %v2007, %v2008
        %v2010 = vadd.f32 %v550, %v566
        %v2011 = vrot.slane %v2010, 4
        %v2012 = vadd.f32 %v2010, %v2011
        %v2013 = vrot.slane %v2012, 2
        %v2014 = vadd.f32 %v2012, %v2013
        %v2015 = vrot.slane %v2014, 1
        %v2016 = vadd.f32 %v2014, %v2015
        %v2017 = vadd.f32 %v551, %v567
        %v2018 = vrot.slane %v2017, 4
        %v2019 = vadd.f32 %v2017, %v2018
        %v2020 = vrot.slane %v2019, 2
        %v2021 = vadd.f32 %v2019, %v2020
        %v2022 = vrot.slane %v2021, 1
        %v2023 = vadd.f32 %v2021, %v2022
        %v2024 = vadd.f32 %v552, %v568
        %v2025 = vrot.slane %v2024, 4
        %v2026 = vadd.f32 %v2024, %v2025
        %v2027 = vrot.slane %v2026, 2
        %v2028 = vadd.f32 %v2026, %v2027
        %v2029 = vrot.slane %v2028, 1
        %v2030 = vadd.f32 %v2028, %v2029
        %v2031 = vadd.f32 %v569, %v585
        %v2032 = vrot.slane %v2031, 4
        %v2033 = vadd.f32 %v2031, %v2032
        %v2034 = vrot.slane %v2033, 2
        %v2035 = vadd.f32 %v2033, %v2034
        %v2036 = vrot.slane %v2035, 1
        %v2037 = vadd.f32 %v2035, %v2036
        %v2038 = vadd.f32 %v570, %v586
        %v2039 = vrot.slane %v2038, 4
        %v2040 = vadd.f32 %v2038, %v2039
        %v2041 = vrot.slane %v2040, 2
        %v2042 = vadd.f32 %v2040, %v2041
        %v2043 = vrot.slane %v2042, 1
        %v2044 = vadd.f32 %v2042, %v2043
        %v2045 = vadd.f32 %v571, %v587
        %v2046 = vrot.slane %v2045, 4
        %v2047 = vadd.f32 %v2045, %v2046
        %v2048 = vrot.slane %v2047, 2
        %v2049 = vadd.f32 %v2047, %v2048
        %v2050 = vrot.slane %v2049, 1
        %v2051 = vadd.f32 %v2049, %v2050
        %v2052 = vadd.f32 %v572, %v588
        %v2053 = vrot.slane %v2052, 4
        %v2054 = vadd.f32 %v2052, %v2053
        %v2055 = vrot.slane %v2054, 2
        %v2056 = vadd.f32 %v2054, %v2055
        %v2057 = vrot.slane %v2056, 1
        %v2058 = vadd.f32 %v2056, %v2057
        %v2059 = vadd.f32 %v573, %v589
        %v2060 = vrot.slane %v2059, 4
        %v2061 = vadd.f32 %v2059, %v2060
        %v2062 = vrot.slane %v2061, 2
        %v2063 = vadd.f32 %v2061, %v2062
        %v2064 = vrot.slane %v2063, 1
        %v2065 = vadd.f32 %v2063, %v2064
        %v2066 = vadd.f32 %v574, %v590
        %v2067 = vrot.slane %v2066, 4
        %v2068 = vadd.f32 %v2066, %v2067
        %v2069 = vrot.slane %v2068, 2
        %v2070 = vadd.f32 %v2068, %v2069
        %v2071 = vrot.slane %v2070, 1
        %v2072 = vadd.f32 %v2070, %v2071
        %v2073 = vadd.f32 %v575, %v591
        %v2074 = vrot.slane %v2073, 4
        %v2075 = vadd.f32 %v2073, %v2074
        %v2076 = vrot.slane %v2075, 2
        %v2077 = vadd.f32 %v2075, %v2076
        %v2078 = vrot.slane %v2077, 1
        %v2079 = vadd.f32 %v2077, %v2078
        %v2080 = vadd.f32 %v576, %v592
        %v2081 = vrot.slane %v2080, 4
        %v2082 = vadd.f32 %v2080, %v2081
        %v2083 = vrot.slane %v2082, 2
        %v2084 = vadd.f32 %v2082, %v2083
        %v2085 = vrot.slane %v2084, 1
        %v2086 = vadd.f32 %v2084, %v2085
        %v2087 = vadd.f32 %v577, %v593
        %v2088 = vrot.slane %v2087, 4
        %v2089 = vadd.f32 %v2087, %v2088
        %v2090 = vrot.slane %v2089, 2
        %v2091 = vadd.f32 %v2089, %v2090
        %v2092 = vrot.slane %v2091, 1
        %v2093 = vadd.f32 %v2091, %v2092
        %v2094 = vadd.f32 %v578, %v594
        %v2095 = vrot.slane %v2094, 4
        %v2096 = vadd.f32 %v2094, %v2095
        %v2097 = vrot.slane %v2096, 2
        %v2098 = vadd.f32 %v2096, %v2097
        %v2099 = vrot.slane %v2098, 1
        %v2100 = vadd.f32 %v2098, %v2099
        %v2101 = vadd.f32 %v579, %v595
        %v2102 = vrot.slane %v2101, 4
        %v2103 = vadd.f32 %v2101, %v2102
        %v2104 = vrot.slane %v2103, 2
        %v2105 = vadd.f32 %v2103, %v2104
        %v2106 = vrot.slane %v2105, 1
        %v2107 = vadd.f32 %v2105, %v2106
        %v2108 = vadd.f32 %v580, %v596
        %v2109 = vrot.slane %v2108, 4
        %v2110 = vadd.f32 %v2108, %v2109
        %v2111 = vrot.slane %v2110, 2
        %v2112 = vadd.f32 %v2110, %v2111
        %v2113 = vrot.slane %v2112, 1
        %v2114 = vadd.f32 %v2112, %v2113
        %v2115 = vadd.f32 %v581, %v597
        %v2116 = vrot.slane %v2115, 4
        %v2117 = vadd.f32 %v2115, %v2116
        %v2118 = vrot.slane %v2117, 2
        %v2119 = vadd.f32 %v2117, %v2118
        %v2120 = vrot.slane %v2119, 1
        %v2121 = vadd.f32 %v2119, %v2120
        %v2122 = vadd.f32 %v582, %v598
        %v2123 = vrot.slane %v2122, 4
        %v2124 = vadd.f32 %v2122, %v2123
        %v2125 = vrot.slane %v2124, 2
        %v2126 = vadd.f32 %v2124, %v2125
        %v2127 = vrot.slane %v2126, 1
        %v2128 = vadd.f32 %v2126, %v2127
        %v2129 = vadd.f32 %v583, %v599
        %v2130 = vrot.slane %v2129, 4
        %v2131 = vadd.f32 %v2129, %v2130
        %v2132 = vrot.slane %v2131, 2
        %v2133 = vadd.f32 %v2131, %v2132
        %v2134 = vrot.slane %v2133, 1
        %v2135 = vadd.f32 %v2133, %v2134
        %v2136 = vadd.f32 %v584, %v600
        %v2137 = vrot.slane %v2136, 4
        %v2138 = vadd.f32 %v2136, %v2137
        %v2139 = vrot.slane %v2138, 2
        %v2140 = vadd.f32 %v2138, %v2139
        %v2141 = vrot.slane %v2140, 1
        %v2142 = vadd.f32 %v2140, %v2141
        %v2143 = vadd.f32 %v601, %v617
        %v2144 = vrot.slane %v2143, 4
        %v2145 = vadd.f32 %v2143, %v2144
        %v2146 = vrot.slane %v2145, 2
        %v2147 = vadd.f32 %v2145, %v2146
        %v2148 = vrot.slane %v2147, 1
        %v2149 = vadd.f32 %v2147, %v2148
        %v2150 = vadd.f32 %v602, %v618
        %v2151 = vrot.slane %v2150, 4
        %v2152 = vadd.f32 %v2150, %v2151
        %v2153 = vrot.slane %v2152, 2
        %v2154 = vadd.f32 %v2152, %v2153
        %v2155 = vrot.slane %v2154, 1
        %v2156 = vadd.f32 %v2154, %v2155
        %v2157 = vadd.f32 %v603, %v619
        %v2158 = vrot.slane %v2157, 4
        %v2159 = vadd.f32 %v2157, %v2158
        %v2160 = vrot.slane %v2159, 2
        %v2161 = vadd.f32 %v2159, %v2160
        %v2162 = vrot.slane %v2161, 1
        %v2163 = vadd.f32 %v2161, %v2162
        %v2164 = vadd.f32 %v604, %v620
        %v2165 = vrot.slane %v2164, 4
        %v2166 = vadd.f32 %v2164, %v2165
        %v2167 = vrot.slane %v2166, 2
        %v2168 = vadd.f32 %v2166, %v2167
        %v2169 = vrot.slane %v2168, 1
        %v2170 = vadd.f32 %v2168, %v2169
        %v2171 = vadd.f32 %v605, %v621
        %v2172 = vrot.slane %v2171, 4
        %v2173 = vadd.f32 %v2171, %v2172
        %v2174 = vrot.slane %v2173, 2
        %v2175 = vadd.f32 %v2173, %v2174
        %v2176 = vrot.slane %v2175, 1
        %v2177 = vadd.f32 %v2175, %v2176
        %v2178 = vadd.f32 %v606, %v622
        %v2179 = vrot.slane %v2178, 4
        %v2180 = vadd.f32 %v2178, %v2179
        %v2181 = vrot.slane %v2180, 2
        %v2182 = vadd.f32 %v2180, %v2181
        %v2183 = vrot.slane %v2182, 1
        %v2184 = vadd.f32 %v2182, %v2183
        %v2185 = vadd.f32 %v607, %v623
        %v2186 = vrot.slane %v2185, 4
        %v2187 = vadd.f32 %v2185, %v2186
        %v2188 = vrot.slane %v2187, 2
        %v2189 = vadd.f32 %v2187, %v2188
        %v2190 = vrot.slane %v2189, 1
        %v2191 = vadd.f32 %v2189, %v2190
        %v2192 = vadd.f32 %v608, %v624
        %v2193 = vrot.slane %v2192, 4
        %v2194 = vadd.f32 %v2192, %v2193
        %v2195 = vrot.slane %v2194, 2
        %v2196 = vadd.f32 %v2194, %v2195
        %v2197 = vrot.slane %v2196, 1
        %v2198 = vadd.f32 %v2196, %v2197
        %v2199 = vadd.f32 %v609, %v625
        %v2200 = vrot.slane %v2199, 4
        %v2201 = vadd.f32 %v2199, %v2200
        %v2202 = vrot.slane %v2201, 2
        %v2203 = vadd.f32 %v2201, %v2202
        %v2204 = vrot.slane %v2203, 1
        %v2205 = vadd.f32 %v2203, %v2204
        %v2206 = vadd.f32 %v610, %v626
        %v2207 = vrot.slane %v2206, 4
        %v2208 = vadd.f32 %v2206, %v2207
        %v2209 = vrot.slane %v2208, 2
        %v2210 = vadd.f32 %v2208, %v2209
        %v2211 = vrot.slane %v2210, 1
        %v2212 = vadd.f32 %v2210, %v2211
        %v2213 = vadd.f32 %v611, %v627
        %v2214 = vrot.slane %v2213, 4
        %v2215 = vadd.f32 %v2213, %v2214
        %v2216 = vrot.slane %v2215, 2
        %v2217 = vadd.f32 %v2215, %v2216
        %v2218 = vrot.slane %v2217, 1
        %v2219 = vadd.f32 %v2217, %v2218
        %v2220 = vadd.f32 %v612, %v628
        %v2221 = vrot.slane %v2220, 4
        %v2222 = vadd.f32 %v2220, %v2221
        %v2223 = vrot.slane %v2222, 2
        %v2224 = vadd.f32 %v2222, %v2223
        %v2225 = vrot.slane %v2224, 1
        %v2226 = vadd.f32 %v2224, %v2225
        %v2227 = vadd.f32 %v613, %v629
        %v2228 = vrot.slane %v2227, 4
        %v2229 = vadd.f32 %v2227, %v2228
        %v2230 = vrot.slane %v2229, 2
        %v2231 = vadd.f32 %v2229, %v2230
        %v2232 = vrot.slane %v2231, 1
        %v2233 = vadd.f32 %v2231, %v2232
        %v2234 = vadd.f32 %v614, %v630
        %v2235 = vrot.slane %v2234, 4
        %v2236 = vadd.f32 %v2234, %v2235
        %v2237 = vrot.slane %v2236, 2
        %v2238 = vadd.f32 %v2236, %v2237
        %v2239 = vrot.slane %v2238, 1
        %v2240 = vadd.f32 %v2238, %v2239
        %v2241 = vadd.f32 %v615, %v631
        %v2242 = vrot.slane %v2241, 4
        %v2243 = vadd.f32 %v2241, %v2242
        %v2244 = vrot.slane %v2243, 2
        %v2245 = vadd.f32 %v2243, %v2244
        %v2246 = vrot.slane %v2245, 1
        %v2247 = vadd.f32 %v2245, %v2246
        %v2248 = vadd.f32 %v616, %v632
        %v2249 = vrot.slane %v2248, 4
        %v2250 = vadd.f32 %v2248, %v2249
        %v2251 = vrot.slane %v2250, 2
        %v2252 = vadd.f32 %v2250, %v2251
        %v2253 = vrot.slane %v2252, 1
        %v2254 = vadd.f32 %v2252, %v2253
        %v2319 = vcombine.low %v1813, %v1820
        %v2320 = vcombine.low %v1827, %v1834
        %v2321 = vcombine.low %v1841, %v1848
        %v2322 = vcombine.low %v1855, %v1862
        %v2323 = vcombine.low %v1869, %v1876
        %v2324 = vcombine.low %v1883, %v1890
        %v2325 = vcombine.low %v1897, %v1904
        %v2326 = vcombine.low %v1911, %v1918
        %v2327 = vcombine.low %v1925, %v1932
        %v2328 = vcombine.low %v1939, %v1946
        %v2329 = vcombine.low %v1953, %v1960
        %v2330 = vcombine.low %v1967, %v1974
        %v2331 = vcombine.low %v1981, %v1988
        %v2332 = vcombine.low %v1995, %v2002
        %v2333 = vcombine.low %v2009, %v2016
        %v2334 = vcombine.low %v2023, %v2030
        %v2335 = vcombine.low %v2037, %v2044
        %v2336 = vcombine.low %v2051, %v2058
        %v2337 = vcombine.low %v2065, %v2072
        %v2338 = vcombine.low %v2079, %v2086
        %v2339 = vcombine.low %v2093, %v2100
        %v2340 = vcombine.low %v2107, %v2114
        %v2341 = vcombine.low %v2121, %v2128
        %v2342 = vcombine.low %v2135, %v2142
        %v2343 = vcombine.low %v2149, %v2156
        %v2344 = vcombine.low %v2163, %v2170
        %v2345 = vcombine.low %v2177, %v2184
        %v2346 = vcombine.low %v2191, %v2198
        %v2347 = vcombine.low %v2205, %v2212
        %v2348 = vcombine.low %v2219, %v2226
        %v2349 = vcombine.low %v2233, %v2240
        %v2350 = vcombine.low %v2247, %v2254
        %v2351 = vrot.slane %v2327, 7
        %v2352 = vsel %vm1698, %v2351, %v2319
        %v2353 = vsel %vm1700, %v2351, %v2352
        %v2354 = vrot.slane %v2335, 6
        %v2355 = vsel %vm1703, %v2354, %v2353
        %v2356 = vsel %vm1705, %v2354, %v2355
        %v2357 = vrot.slane %v2343, 5
        %v2358 = vsel %vm1708, %v2357, %v2356
        %v2359 = vsel %vm1710, %v2357, %v2358
        %v2360 = vrot.slane %v2328, 7
        %v2361 = vsel %vm1698, %v2360, %v2320
        %v2362 = vsel %vm1700, %v2360, %v2361
        %v2363 = vrot.slane %v2336, 6
        %v2364 = vsel %vm1703, %v2363, %v2362
        %v2365 = vsel %vm1705, %v2363, %v2364
        %v2366 = vrot.slane %v2344, 5
        %v2367 = vsel %vm1708, %v2366, %v2365
        %v2368 = vsel %vm1710, %v2366, %v2367
        %v2369 = vrot.slane %v2329, 7
        %v2370 = vsel %vm1698, %v2369, %v2321
        %v2371 = vsel %vm1700, %v2369, %v2370
        %v2372 = vrot.slane %v2337, 6
        %v2373 = vsel %vm1703, %v2372, %v2371
        %v2374 = vsel %vm1705, %v2372, %v2373
        %v2375 = vrot.slane %v2345, 5
        %v2376 = vsel %vm1708, %v2375, %v2374
        %v2377 = vsel %vm1710, %v2375, %v2376
        %v2378 = vrot.slane %v2330, 7
        %v2379 = vsel %vm1698, %v2378, %v2322
        %v2380 = vsel %vm1700, %v2378, %v2379
        %v2381 = vrot.slane %v2338, 6
        %v2382 = vsel %vm1703, %v2381, %v2380
        %v2383 = vsel %vm1705, %v2381, %v2382
        %v2384 = vrot.slane %v2346, 5
        %v2385 = vsel %vm1708, %v2384, %v2383
        %v2386 = vsel %vm1710, %v2384, %v2385
        %v2387 = vrot.slane %v2331, 7
        %v2388 = vsel %vm1698, %v2387, %v2323
        %v2389 = vsel %vm1700, %v2387, %v2388
        %v2390 = vrot.slane %v2339, 6
        %v2391 = vsel %vm1703, %v2390, %v2389
        %v2392 = vsel %vm1705, %v2390, %v2391
        %v2393 = vrot.slane %v2347, 5
        %v2394 = vsel %vm1708, %v2393, %v2392
        %v2395 = vsel %vm1710, %v2393, %v2394
        %v2396 = vrot.slane %v2332, 7
        %v2397 = vsel %vm1698, %v2396, %v2324
        %v2398 = vsel %vm1700, %v2396, %v2397
        %v2399 = vrot.slane %v2340, 6
        %v2400 = vsel %vm1703, %v2399, %v2398
        %v2401 = vsel %vm1705, %v2399, %v2400
        %v2402 = vrot.slane %v2348, 5
        %v2403 = vsel %vm1708, %v2402, %v2401
        %v2404 = vsel %vm1710, %v2402, %v2403
        %v2405 = vrot.slane %v2333, 7
        %v2406 = vsel %vm1698, %v2405, %v2325
        %v2407 = vsel %vm1700, %v2405, %v2406
        %v2408 = vrot.slane %v2341, 6
        %v2409 = vsel %vm1703, %v2408, %v2407
        %v2410 = vsel %vm1705, %v2408, %v2409
        %v2411 = vrot.slane %v2349, 5
        %v2412 = vsel %vm1708, %v2411, %v2410
        %v2413 = vsel %vm1710, %v2411, %v2412
        %v2414 = vrot.slane %v2334, 7
        %v2415 = vsel %vm1698, %v2414, %v2326
        %v2416 = vsel %vm1700, %v2414, %v2415
        %v2417 = vrot.slane %v2342, 6
        %v2418 = vsel %vm1703, %v2417, %v2416
        %v2419 = vsel %vm1705, %v2417, %v2418
        %v2420 = vrot.slane %v2350, 5
        %v2421 = vsel %vm1708, %v2420, %v2419
        %v2422 = vsel %vm1710, %v2420, %v2421
        %v2431 = vadd.f32 %v1799, %v2359
        %v2432 = vadd.f32 %v1800, %v2368
        %v2433 = vadd.f32 %v1801, %v2377
        %v2434 = vadd.f32 %v1802, %v2386
        %v2435 = vadd.f32 %v1803, %v2395
        %v2436 = vadd.f32 %v1804, %v2404
        %v2437 = vadd.f32 %v1805, %v2413
        %v2438 = vadd.f32 %v1806, %v2422
        %2439 = vst [vmem:[#allocation3] sm:$0xff] %v2431
        %2440 = vst [vmem:[#allocation3 + $0x8] sm:$0xff] %v2432
        %2441 = vst [vmem:[#allocation3 + $0x10] sm:$0xff] %v2433
        %2442 = vst [vmem:[#allocation3 + $0x18] sm:$0xff] %v2434
        %2443 = vst [vmem:[#allocation3 + $0x20] sm:$0xff] %v2435
        %2444 = vst [vmem:[#allocation3 + $0x28] sm:$0xff] %v2436
        %2445 = vst [vmem:[#allocation3 + $0x30] sm:$0xff] %v2437
        %2446 = vst [vmem:[#allocation3 + $0x38] sm:$0xff] %v2438
        // Predicated region
        $region41: #{tpu_custom_call.1} parent=27 // pred_check
          %p2447 = pneg %p229
        $region42: #{tpu_custom_call.1} parent=27 // pred_check_branch
          %2449 = sbr.rel (%p2447) target = $region44
        $region43: #{tpu_custom_call.1} parent=27 // pred_region
          %v2450 = vld [vmem:[#allocation2] sm:$0xff]
          %v2451 = vld [vmem:[#allocation2 + $0x8] sm:$0xff]
          %v2452 = vld [vmem:[#allocation2 + $0x10] sm:$0xff]
          %v2453 = vld [vmem:[#allocation2 + $0x18] sm:$0xff]
          %v2454 = vld [vmem:[#allocation2 + $0x20] sm:$0xff]
          %v2455 = vld [vmem:[#allocation2 + $0x28] sm:$0xff]
          %v2456 = vld [vmem:[#allocation2 + $0x30] sm:$0xff]
          %v2457 = vld [vmem:[#allocation2 + $0x38] sm:$0xff]
          %v2458 = vadd.f32 %v2450, 1.0
          %v2459 = vadd.f32 %v2451, 1.0
          %v2460 = vadd.f32 %v2452, 1.0
          %v2461 = vadd.f32 %v2453, 1.0
          %v2462 = vadd.f32 %v2454, 1.0
          %v2463 = vadd.f32 %v2455, 1.0
          %v2464 = vadd.f32 %v2456, 1.0
          %v2465 = vadd.f32 %v2457, 1.0
          %v2466 = vld [vmem:[#allocation3] sm:$0xff]
          %v2467 = vld [vmem:[#allocation3 + $0x8] sm:$0xff]
          %v2468 = vld [vmem:[#allocation3 + $0x10] sm:$0xff]
          %v2469 = vld [vmem:[#allocation3 + $0x18] sm:$0xff]
          %v2470 = vld [vmem:[#allocation3 + $0x20] sm:$0xff]
          %v2471 = vld [vmem:[#allocation3 + $0x28] sm:$0xff]
          %v2472 = vld [vmem:[#allocation3 + $0x30] sm:$0xff]
          %v2473 = vld [vmem:[#allocation3 + $0x38] sm:$0xff]
          %v2474 = vadd.f32 %v2466, 1.0
          %v2475 = vadd.f32 %v2467, 1.0
          %v2476 = vadd.f32 %v2468, 1.0
          %v2477 = vadd.f32 %v2469, 1.0
          %v2478 = vadd.f32 %v2470, 1.0
          %v2479 = vadd.f32 %v2471, 1.0
          %v2480 = vadd.f32 %v2472, 1.0
          %v2481 = vadd.f32 %v2473, 1.0
          %v2482 = vrcp.pop %v2474
          %v2483 = vmul.f32 %v2458, %v2482
          %v2484 = vrcp.pop %v2475
          %v2485 = vmul.f32 %v2459, %v2484
          %v2486 = vrcp.pop %v2476
          %v2487 = vmul.f32 %v2460, %v2486
          %v2488 = vrcp.pop %v2477
          %v2489 = vmul.f32 %v2461, %v2488
          %v2490 = vrcp.pop %v2478
          %v2491 = vmul.f32 %v2462, %v2490
          %v2492 = vrcp.pop %v2479
          %v2493 = vmul.f32 %v2463, %v2492
          %v2494 = vrcp.pop %v2480
          %v2495 = vmul.f32 %v2464, %v2494
          %v2496 = vrcp.pop %v2481
          %v2497 = vmul.f32 %v2465, %v2496
          %2498 = vst [vmem:[%s223] sm:$0xff] %v2483
          %2499 = vst [vmem:[%s223 + $0x8] sm:$0xff] %v2485
          %2500 = vst [vmem:[%s223 + $0x10] sm:$0xff] %v2487
          %2501 = vst [vmem:[%s223 + $0x18] sm:$0xff] %v2489
          %2502 = vst [vmem:[%s223 + $0x20] sm:$0xff] %v2491
          %2503 = vst [vmem:[%s223 + $0x28] sm:$0xff] %v2493
          %2504 = vst [vmem:[%s223 + $0x30] sm:$0xff] %v2495
          %2505 = vst [vmem:[%s223 + $0x38] sm:$0xff] %v2497
        $region44: #{tpu_custom_call.1} parent=27 // pred_fallthru
          _
        %s2506 = sand.u32 %s98, 1
        %s2507 = scalar_lea.sflag [#allocation6], %s2506
        %s2508 = sand.u32 %s98, 1
        %s2509 = smul.addr %s2508, 64
        %s2510 = scalar_lea.vmem [#allocation9], %s2509
        // Predicated region
        $region45: #{tpu_custom_call.1} parent=27 // pred_check
          %p2511 = pneg %p108
        $region46: #{tpu_custom_call.1} parent=27 // pred_check_branch
          %2513 = sbr.rel (%p2511) target = $region48
        $region47: #{tpu_custom_call.1} parent=27 // pred_region
          %s2514 = smul.u32 16, %s26
          %s2516 = ssub.s32 1024, 1024
          %2517 = vsyncadd %s2507, %s2516
          %s2518 = smul.addr %s2514, 64
          %s2519 = scalar_lea.hbm %s2, %s2518
          %s2521 = sshll.u32 %s2510, 4
          %s2522 = int_to_ptr.vmem [resolvable:$true] %s2521
          %2524 = dma.vmem_to_hbm [thread:$0]  %s2522, 1024, %s2519, %s2507
        $region48: #{tpu_custom_call.1} parent=27 // pred_fallthru
          _
      $region28: #{tpu_custom_call.1} parent=5 // pred_fallthru
        _
      %p2525 = scmp.le.s32.totalorder 2, %s17
      // Predicated region
      $region49: #{tpu_custom_call.1} parent=5 // pred_check
        %p2526 = pneg %p2525
      $region50: #{tpu_custom_call.1} parent=5 // pred_check_branch
        %2528 = sbr.rel (%p2526) target = $region52
      $region51: #{tpu_custom_call.1} parent=5 // pred_region
        %s2529 = ssub.s32 %s17, 2
        // Predicated region
        $region53: #{tpu_custom_call.1} parent=51 // pred_check
          %p2530 = pneg %p114
        $region54: #{tpu_custom_call.1} parent=51 // pred_check_branch
          %2532 = sbr.rel (%p2530) target = $region56
        $region55: #{tpu_custom_call.1} parent=51 // pred_region
          %s2533 = sand.u32 %s99, 1
          %s2534 = scalar_lea.sflag [#allocation6], %s2533
          %s2535 = sand.u32 %s99, 1
          %s2536 = smul.addr %s2535, 64
          %s2537 = scalar_lea.vmem [#allocation9], %s2536
          %2538 = dma.done %s2534, 1024
        $region56: #{tpu_custom_call.1} parent=51 // pred_fallthru
          _
      $region52: #{tpu_custom_call.1} parent=5 // pred_fallthru
        _
    $region6: #{tpu_custom_call.1} parent=1 // loop_footer
      %s21 = sadd.s32 1, %s17
    $region7: #{tpu_custom_call.1} parent=1 // loop_footer_branch
      %16 = sbr.rel target = $region3
    $region8: #{tpu_custom_call.1} parent=1 // loop_exit
      _
    %2539 = vsyncpa [#allocation5], 1
    %s2540 = scalar_lea.sflag [#allocation5], 1
    %2541 = vsyncpa %s2540, 1
    %2542 = vsyncpa [#allocation8], 1
    %s2543 = scalar_lea.sflag [#allocation8], 1
    %2544 = vsyncpa %s2543, 1
    %2545 = vsyncpa [#allocation6], 1
    %s2546 = scalar_lea.sflag [#allocation6], 1
    %2547 = vsyncpa %s2546, 1

</llo_original>
